<compile_context>
chip_gen: v6e
topology: v6e:2x2x1
jax: 0.10.0
libtpu: 0.0.40
codegen_flags: <defaults>
</compile_context>

<pallas_src>
import jax
import jax.numpy as jnp
from jax.experimental import pallas as pl
from jax.experimental.pallas import tpu as pltpu

DIM = 144          # Linear(288, 144)  =>  mixer dim = 144
EPS = 1e-5         # nn.LayerNorm default eps


# ----------------------------- in-kernel helpers -----------------------------

def _ln_bf16(r, w, b):
    """Affine LayerNorm over the last axis; f32 stats, bf16 output."""
    mu = jnp.mean(r, axis=-1, keepdims=True)
    c = r - mu
    var = jnp.mean(c * c, axis=-1, keepdims=True)
    return (c * jax.lax.rsqrt(var + EPS) * w + b).astype(jnp.bfloat16)


def _rev_rows(h, perm):
    """Reverse the rows (sublanes) of a (TL, D) bf16 array.

    Uses a small (C, C) anti-identity matmul per 128-row chunk (exact 0/1 row
    selection on the MXU) plus static chunk reordering — O(TL*C*D) instead of
    O(TL^2*D), with the perm hoisted to a VMEM-resident kernel input.
    """
    C = perm.shape[0]
    K = h.shape[0] // C
    if K == 1:
        return jnp.dot(perm, h, preferred_element_type=jnp.float32
                       ).astype(jnp.bfloat16)
    parts = [jnp.dot(perm, h[(K - 1 - c) * C:(K - c) * C, :],
                     preferred_element_type=jnp.float32).astype(jnp.bfloat16)
             for c in range(K)]
    return jnp.concatenate(parts, axis=0)


def _branch_out(h_f, h_b, wf, wb, bias, perm):
    """h_f @ WF + reverse_rows(h_b) @ WB + bias   (f32 result)."""
    return (jnp.dot(h_f, wf, preferred_element_type=jnp.float32)
            + jnp.dot(_rev_rows(h_b, perm), wb,
                      preferred_element_type=jnp.float32)
            + bias)


# --------------------------------- kernels -----------------------------------

def _biblock_pair_kernel(hs_lo_ref, res_lo_ref, hs_hi_ref, res_hi_ref,
                         ln_w_ref, ln_b_ref, wf_ref, wb_ref, bias_ref, perm_ref,
                         out_ref, res_out_ref,
                         h_lo_sc, h_hi_sc):
    """Grid (B, nP, 2).  For pair p: tiles l=p ('lo') and m=nL-1-p ('hi').

    s=0: LN both tiles once, stash bf16 LN outputs in scratch, emit output
         tile l and residual tile l.
    s=1: reuse stashed LN outputs, emit output tile m and residual tile m.
    """
    s = pl.program_id(2)
    ln_w = ln_w_ref[0]
    ln_b = ln_b_ref[0]

    @pl.when(s == 0)
    def _():
        r_lo = hs_lo_ref[0] + res_lo_ref[0]
        r_hi = hs_hi_ref[0] + res_hi_ref[0]
        res_out_ref[0] = r_lo
        h_lo = _ln_bf16(r_lo, ln_w, ln_b)
        h_hi = _ln_bf16(r_hi, ln_w, ln_b)
        h_lo_sc[...] = h_lo
        h_hi_sc[...] = h_hi
        out_ref[0] = _branch_out(h_lo, h_hi, wf_ref[...], wb_ref[...],
                                 bias_ref[0], perm_ref[...]).astype(out_ref.dtype)

    @pl.when(s == 1)
    def _():
        # Inputs are still VMEM-resident (block indices unchanged); the add is
        # a trivial VPU op, so recompute r_hi instead of stashing it in f32.
        res_out_ref[0] = hs_hi_ref[0] + res_hi_ref[0]
        out_ref[0] = _branch_out(h_hi_sc[...], h_lo_sc[...],
                                 wf_ref[...], wb_ref[...],
                                 bias_ref[0], perm_ref[...]).astype(out_ref.dtype)


def _biblock_pair_kernel_nores(hs_lo_ref, hs_hi_ref,
                               ln_w_ref, ln_b_ref, wf_ref, wb_ref, bias_ref,
                               perm_ref, out_ref, h_lo_sc, h_hi_sc):
    """First-block path: residual == hidden_states; no residual streams/output."""
    s = pl.program_id(2)

    @pl.when(s == 0)
    def _():
        h_lo = _ln_bf16(hs_lo_ref[0], ln_w_ref[0], ln_b_ref[0])
        h_hi = _ln_bf16(hs_hi_ref[0], ln_w_ref[0], ln_b_ref[0])
        h_lo_sc[...] = h_lo
        h_hi_sc[...] = h_hi
        out_ref[0] = _branch_out(h_lo, h_hi, wf_ref[...], wb_ref[...],
                                 bias_ref[0], perm_ref[...]).astype(out_ref.dtype)

    @pl.when(s == 1)
    def _():
        out_ref[0] = _branch_out(h_hi_sc[...], h_lo_sc[...],
                                 wf_ref[...], wb_ref[...],
                                 bias_ref[0], perm_ref[...]).astype(out_ref.dtype)


# --------------------------------- wrapper -----------------------------------

def _pick_seq_tile(L):
    # 512 is a good default across v5e/v6e/v7x (≈85% of HBM roofline, fits the
    # v5e 16 MiB / v7x 32 MiB scoped-VMEM defaults with headroom).
    for cand in (512, 256, 128, 64, 32, 16, 8):
        if L % cand == 0:
            return cand
    return L


def _anti_identity(C):
    r = jax.lax.broadcasted_iota(jnp.int32, (C, C), 0)
    c = jax.lax.broadcasted_iota(jnp.int32, (C, C), 1)
    return jnp.where(r + c == C - 1, 1.0, 0.0).astype(jnp.bfloat16)


def fuse_params(params):
    """Fold the (linear per-token) mixers into the split halves of LL_hidden.

    Call ONCE per parameter set (hoisted out of the forward per the review):
        out = LN(r) @ (Wf@Wll_f) + flip(LN(r)) @ (Wb@Wll_b) + fused_bias
    Weights are cast to bf16 for the MXU; the fused bias stays f32.
    """
    wf = jnp.dot(params["wf"], params["wll_f"]).astype(jnp.bfloat16)
    wb = jnp.dot(params["wb"], params["wll_b"]).astype(jnp.bfloat16)
    bias = (jnp.dot(params["bf"], params["wll_f"])
            + jnp.dot(params["bb"], params["wll_b"])
            + params["bll"])                                   # (1, D) f32
    return dict(ln_w=params["ln_w"], ln_b=params["ln_b"],
                wf=wf, wb=wb, bias=bias)


def biblock_forward(hidden_states, residual, fused, *, seq_tile=None):
    """hidden_states, residual: (B, L, DIM) float32; residual may be None.

    `fused` is the output of fuse_params().  Returns (out, residual_out).
    """
    B, L, D = hidden_states.shape
    assert D == DIM

    TL = _pick_seq_tile(L) if seq_tile is None else seq_tile
    assert L % TL == 0
    nL = L // TL
    nP = (nL + 1) // 2                      # mirror pairs (odd nL: middle self-pair)
    C = 128 if TL % 128 == 0 else TL        # row-reverse chunk size
    perm = _anti_identity(C)                # hoisted: built once, VMEM-resident

    lo_spec = pl.BlockSpec((1, TL, D), lambda b, p, s: (b, p, 0))
    hi_spec = pl.BlockSpec((1, TL, D), lambda b, p, s: (b, nL - 1 - p, 0))
    vec_spec = pl.BlockSpec((1, D), lambda b, p, s: (0, 0))
    mat_spec = pl.BlockSpec((D, D), lambda b, p, s: (0, 0))
    perm_spec = pl.BlockSpec((C, C), lambda b, p, s: (0, 0))
    # s=0 writes tile p, s=1 writes tile nL-1-p (same tile for the odd middle pair).
    out_spec = pl.BlockSpec((1, TL, D),
                            lambda b, p, s: (b, p + s * (nL - 1 - 2 * p), 0))

    scratch = [pltpu.VMEM((TL, D), jnp.bfloat16),   # LN(lo tile), bf16
               pltpu.VMEM((TL, D), jnp.bfloat16)]   # LN(hi tile), bf16

    cparams = pltpu.CompilerParams(
        dimension_semantics=("parallel", "parallel", "arbitrary"),
        vmem_limit_bytes=32 * 1024 * 1024)

    if residual is None:
        out = pl.pallas_call(
            _biblock_pair_kernel_nores,
            out_shape=jax.ShapeDtypeStruct((B, L, D), hidden_states.dtype),
            grid_spec=pltpu.PrefetchScalarGridSpec(
                num_scalar_prefetch=0,
                grid=(B, nP, 2),
                in_specs=[lo_spec, hi_spec,
                          vec_spec, vec_spec, mat_spec, mat_spec, vec_spec,
                          perm_spec],
                out_specs=out_spec,
                scratch_shapes=scratch),
            compiler_params=cparams,
        )(hidden_states, hidden_states,
          fused["ln_w"], fused["ln_b"], fused["wf"], fused["wb"], fused["bias"],
          perm)
        # First-block residual is exactly the input hidden_states.
        return out, hidden_states

    out, res_out = pl.pallas_call(
        _biblock_pair_kernel,
        out_shape=(jax.ShapeDtypeStruct((B, L, D), hidden_states.dtype),
                   jax.ShapeDtypeStruct((B, L, D), hidden_states.dtype)),
        grid_spec=pltpu.PrefetchScalarGridSpec(
            num_scalar_prefetch=0,
            grid=(B, nP, 2),
            in_specs=[lo_spec, lo_spec, hi_spec, hi_spec,
                      vec_spec, vec_spec, mat_spec, mat_spec, vec_spec,
                      perm_spec],
            out_specs=[out_spec, out_spec],
            scratch_shapes=scratch),
        compiler_params=cparams,
    )(hidden_states, residual, hidden_states, residual,
      fused["ln_w"], fused["ln_b"], fused["wf"], fused["wb"], fused["bias"],
      perm)
    return out, res_out


# ------------------------------ params & reference ---------------------------

def init_params(key):
    """Deterministic synthetic parameters matching the module's shapes."""
    ks = jax.random.split(key, 6)
    scale = 0.05
    # LayerNorm(dim): weight ones, bias zeros.
    ln_w = jnp.ones((1, DIM), jnp.float32)
    ln_b = jnp.zeros((1, DIM), jnp.float32)
    # mixer / inverse_mixer as Linear(dim, dim): stored pre-transposed (in, out).
    wf = scale * jax.random.normal(ks[0], (DIM, DIM), jnp.float32)
    bf = scale * jax.random.normal(ks[1], (1, DIM), jnp.float32)
    wb = scale * jax.random.normal(ks[2], (DIM, DIM), jnp.float32)
    bb = scale * jax.random.normal(ks[3], (1, DIM), jnp.float32)
    # LL_hidden = Linear(288, 144): weight (144, 288); split & transpose.
    wll = scale * jax.random.normal(ks[4], (DIM, 2 * DIM), jnp.float32)
    wll_f = wll[:, :DIM].T            # (DIM, DIM) acting on forward branch
    wll_b = wll[:, DIM:].T            # (DIM, DIM) acting on backward branch
    bll = scale * jax.random.normal(ks[5], (1, DIM), jnp.float32)
    return dict(ln_w=ln_w, ln_b=ln_b, wf=wf, bf=bf, wb=wb, bb=bb,
                wll_f=wll_f, wll_b=wll_b, bll=bll)


def biblock_reference(hidden_states, residual, p):
    """Pure-JAX f32 reference of the same forward pass (for verification)."""
    if residual is None:
        residual = jnp.zeros_like(hidden_states)
    r = hidden_states + residual
    mu = jnp.mean(r, axis=-1, keepdims=True)
    var = jnp.mean((r - mu) ** 2, axis=-1, keepdims=True)
    h = (r - mu) * jax.lax.rsqrt(var + EPS) * p["ln_w"][0] + p["ln_b"][0]
    f = h @ p["wf"] + p["bf"][0]
    b = jnp.flip(h, axis=1) @ p["wb"] + p["bb"][0]
    out = f @ p["wll_f"] + b @ p["wll_b"] + p["bll"][0]
    return out, r


# ----------------------------------- main ------------------------------------

if __name__ == "__main__":
    key = jax.random.PRNGKey(0)
    k_x, k_r, k_p, k_x2, k_r2 = jax.random.split(key, 5)

    params = init_params(k_p)
    fused = fuse_params(params)          # hoisted: once per parameter set

    # --- small shape: single tile, self-pair path -----------------------------
    B, L = 2, 8
    hidden_states = jax.random.normal(k_x, (B, L, DIM), jnp.float32)
    residual = jax.random.normal(k_r, (B, L, DIM), jnp.float32)

    out, res_out = biblock_forward(hidden_states, residual, fused)
    jax.block_until_ready((out, res_out))
    ref_out, ref_res = biblock_reference(hidden_states, residual, params)
    assert out.shape == (B, L, DIM) and res_out.shape == (B, L, DIM)
    # Residual stream is a pure f32 add -> exact.
    assert jnp.allclose(res_out, ref_res, atol=1e-5, rtol=1e-5)
    # Matmuls run in bf16 (f32 accumulation) -> loosened tolerance vs f32 ref.
    assert jnp.allclose(out, ref_out, atol=2e-2, rtol=2e-2), \
        float(jnp.max(jnp.abs(out - ref_out)))

    # --- specialized residual=None (first block) path --------------------------
    out0, res0 = biblock_forward(hidden_states, None, fused)
    jax.block_until_ready((out0, res0))
    ref_out0, ref_res0 = biblock_reference(hidden_states, None, params)
    assert jnp.allclose(res0, ref_res0, atol=1e-5, rtol=1e-5)
    assert jnp.allclose(out0, ref_out0, atol=2e-2, rtol=2e-2)

    # --- multi-tile: odd pair count (middle self-pair) + chunked row reverse ---
    B2, L2 = 2, 768                      # -> TL=256, nL=3 (odd), C=128, 2 chunks
    hs2 = jax.random.normal(k_x2, (B2, L2, DIM), jnp.float32)
    res2 = jax.random.normal(k_r2, (B2, L2, DIM), jnp.float32)
    out2, rout2 = biblock_forward(hs2, res2, fused)
    jax.block_until_ready((out2, rout2))
    ref_out2, ref_res2 = biblock_reference(hs2, res2, params)
    assert jnp.allclose(rout2, ref_res2, atol=1e-5, rtol=1e-5)
    assert jnp.allclose(out2, ref_out2, atol=2e-2, rtol=2e-2), \
        float(jnp.max(jnp.abs(out2 - ref_out2)))

    print("KERNEL_OK")
</pallas_src>

<mosaic_0001>
module attributes {stable_mosaic.version = 11 : i64} {
  func.func @_biblock_pair_kernel(%arg0: i32, %arg1: i32, %arg2: i32, %arg3: memref<1x8x144xf32, #tpu.memory_space<vmem>>, %arg4: memref<1x8x144xf32, #tpu.memory_space<vmem>>, %arg5: memref<1x8x144xf32, #tpu.memory_space<vmem>>, %arg6: memref<1x8x144xf32, #tpu.memory_space<vmem>>, %arg7: memref<1x144xf32, #tpu.memory_space<vmem>>, %arg8: memref<1x144xf32, #tpu.memory_space<vmem>>, %arg9: memref<144x144xbf16, #tpu.memory_space<vmem>>, %arg10: memref<144x144xbf16, #tpu.memory_space<vmem>>, %arg11: memref<1x144xf32, #tpu.memory_space<vmem>>, %arg12: memref<8x8xbf16, #tpu.memory_space<vmem>>, %arg13: memref<1x8x144xf32, #tpu.memory_space<vmem>>, %arg14: memref<1x8x144xf32, #tpu.memory_space<vmem>>, %arg15: memref<8x144xbf16, #tpu.memory_space<vmem>>, %arg16: memref<8x144xbf16, #tpu.memory_space<vmem>>) attributes {dimension_semantics = [#tpu.dimension_semantics<parallel>, #tpu.dimension_semantics<parallel>, #tpu.dimension_semantics<arbitrary>], iteration_bounds = array<i64: 2, 1, 2>, scalar_prefetch = 0 : i64, scratch_operands = 2 : i64, tpu.core_type = #tpu.core_type<tc>, window_params = [{transform_indices = @transform_0, window_bounds = array<i64: 1, 8, 144>}, {transform_indices = @transform_1, window_bounds = array<i64: 1, 8, 144>}, {transform_indices = @transform_2, window_bounds = array<i64: 1, 8, 144>}, {transform_indices = @transform_3, window_bounds = array<i64: 1, 8, 144>}, {pipeline_mode = #tpu.pipeline_mode<synchronous>, transform_indices = @transform_4, window_bounds = array<i64: 1, 144>}, {pipeline_mode = #tpu.pipeline_mode<synchronous>, transform_indices = @transform_5, window_bounds = array<i64: 1, 144>}, {pipeline_mode = #tpu.pipeline_mode<synchronous>, transform_indices = @transform_6, window_bounds = array<i64: 144, 144>}, {pipeline_mode = #tpu.pipeline_mode<synchronous>, transform_indices = @transform_7, window_bounds = array<i64: 144, 144>}, {pipeline_mode = #tpu.pipeline_mode<synchronous>, transform_indices = @transform_8, window_bounds = array<i64: 1, 144>}, {pipeline_mode = #tpu.pipeline_mode<synchronous>, transform_indices = @transform_9, window_bounds = array<i64: 8, 8>}, {transform_indices = @transform_10, window_bounds = array<i64: 1, 8, 144>}, {transform_indices = @transform_11, window_bounds = array<i64: 1, 8, 144>}]} {
    %c0 = arith.constant 0 : index
    %c0_0 = arith.constant 0 : index
    %0 = vector.load %arg7[%c0, %c0_0] : memref<1x144xf32, #tpu.memory_space<vmem>>, vector<1x144xf32>
    %1 = vector.shape_cast %0 : vector<1x144xf32> to vector<144xf32>
    %c0_1 = arith.constant 0 : index
    %c0_2 = arith.constant 0 : index
    %2 = vector.load %arg8[%c0_1, %c0_2] : memref<1x144xf32, #tpu.memory_space<vmem>>, vector<1x144xf32>
    %3 = vector.shape_cast %2 : vector<1x144xf32> to vector<144xf32>
    %c0_i32 = arith.constant 0 : i32
    %4 = arith.cmpi eq, %arg2, %c0_i32 : i32
    %5 = arith.extui %4 : i1 to i32
    %c0_i32_3 = arith.constant 0 : i32
    %6 = arith.cmpi ne, %5, %c0_i32_3 : i32
    scf.if %6 {
      %c0_5 = arith.constant 0 : index
      %c0_6 = arith.constant 0 : index
      %c0_7 = arith.constant 0 : index
      %10 = vector.load %arg3[%c0_5, %c0_6, %c0_7] : memref<1x8x144xf32, #tpu.memory_space<vmem>>, vector<1x8x144xf32>
      %11 = vector.shape_cast %10 : vector<1x8x144xf32> to vector<8x144xf32>
      %c0_8 = arith.constant 0 : index
      %c0_9 = arith.constant 0 : index
      %c0_10 = arith.constant 0 : index
      %12 = vector.load %arg4[%c0_8, %c0_9, %c0_10] : memref<1x8x144xf32, #tpu.memory_space<vmem>>, vector<1x8x144xf32>
      %13 = vector.shape_cast %12 : vector<1x8x144xf32> to vector<8x144xf32>
      %14 = arith.addf %11, %13 : vector<8x144xf32>
      %c0_11 = arith.constant 0 : index
      %c0_12 = arith.constant 0 : index
      %c0_13 = arith.constant 0 : index
      %15 = vector.load %arg5[%c0_11, %c0_12, %c0_13] : memref<1x8x144xf32, #tpu.memory_space<vmem>>, vector<1x8x144xf32>
      %16 = vector.shape_cast %15 : vector<1x8x144xf32> to vector<8x144xf32>
      %c0_14 = arith.constant 0 : index
      %c0_15 = arith.constant 0 : index
      %c0_16 = arith.constant 0 : index
      %17 = vector.load %arg6[%c0_14, %c0_15, %c0_16] : memref<1x8x144xf32, #tpu.memory_space<vmem>>, vector<1x8x144xf32>
      %18 = vector.shape_cast %17 : vector<1x8x144xf32> to vector<8x144xf32>
      %19 = arith.addf %16, %18 : vector<8x144xf32>
      %c0_17 = arith.constant 0 : index
      %c0_18 = arith.constant 0 : index
      %c0_19 = arith.constant 0 : index
      %20 = vector.load %arg14[%c0_17, %c0_18, %c0_19] : memref<1x8x144xf32, #tpu.memory_space<vmem>>, vector<1x8x144xf32>
      %21 = vector.shape_cast %20 : vector<1x8x144xf32> to vector<8x144xf32>
      %22 = vector.shape_cast %14 : vector<8x144xf32> to vector<1x8x144xf32>
      tpu.vector_store %arg14[%c0_17, %c0_18, %c0_19], %22 {strides = array<i32>} : memref<1x8x144xf32, #tpu.memory_space<vmem>>, vector<1x8x144xf32>,
      %cst = arith.constant dense<0.000000e+00> : vector<8xf32>
      %23 = vector.multi_reduction <add>, %14, %cst [1] : vector<8x144xf32> to vector<8xf32>
      %24 = vector.shape_cast %23 : vector<8xf32> to vector<8x1xf32>
      %cst_20 = arith.constant 1.440000e+02 : f32
      %25 = vector.broadcast %cst_20 : f32 to vector<8x1xf32>
      %26 = arith.divf %24, %25 : vector<8x1xf32>
      %27 = vector.broadcast %26 : vector<8x1xf32> to vector<8x144xf32>
      %28 = arith.subf %14, %27 : vector<8x144xf32>
      %29 = arith.mulf %28, %28 : vector<8x144xf32>
      %cst_21 = arith.constant dense<0.000000e+00> : vector<8xf32>
      %30 = vector.multi_reduction <add>, %29, %cst_21 [1] : vector<8x144xf32> to vector<8xf32>
      %31 = vector.shape_cast %30 : vector<8xf32> to vector<8x1xf32>
      %cst_22 = arith.constant 1.440000e+02 : f32
      %32 = vector.broadcast %cst_22 : f32 to vector<8x1xf32>
      %33 = arith.divf %31, %32 : vector<8x1xf32>
      %cst_23 = arith.constant 9.99999974E-6 : f32
      %34 = vector.broadcast %cst_23 : f32 to vector<8x1xf32>
      %35 = arith.addf %33, %34 : vector<8x1xf32>
      %36 = math.rsqrt %35 : vector<8x1xf32>
      %37 = vector.broadcast %36 : vector<8x1xf32> to vector<8x144xf32>
      %38 = arith.mulf %28, %37 : vector<8x144xf32>
      %39 = vector.shape_cast %1 : vector<144xf32> to vector<1x144xf32>
      %40 = vector.broadcast %39 : vector<1x144xf32> to vector<8x144xf32>
      %41 = arith.mulf %38, %40 : vector<8x144xf32>
      %42 = vector.shape_cast %3 : vector<144xf32> to vector<1x144xf32>
      %43 = vector.broadcast %42 : vector<1x144xf32> to vector<8x144xf32>
      %44 = arith.addf %41, %43 : vector<8x144xf32>
      %45 = arith.truncf %44 : vector<8x144xf32> to vector<8x144xbf16>
      %cst_24 = arith.constant dense<0.000000e+00> : vector<8xf32>
      %46 = vector.multi_reduction <add>, %19, %cst_24 [1] : vector<8x144xf32> to vector<8xf32>
      %47 = vector.shape_cast %46 : vector<8xf32> to vector<8x1xf32>
      %cst_25 = arith.constant 1.440000e+02 : f32
      %48 = vector.broadcast %cst_25 : f32 to vector<8x1xf32>
      %49 = arith.divf %47, %48 : vector<8x1xf32>
      %50 = vector.broadcast %49 : vector<8x1xf32> to vector<8x144xf32>
      %51 = arith.subf %19, %50 : vector<8x144xf32>
      %52 = arith.mulf %51, %51 : vector<8x144xf32>
      %cst_26 = arith.constant dense<0.000000e+00> : vector<8xf32>
      %53 = vector.multi_reduction <add>, %52, %cst_26 [1] : vector<8x144xf32> to vector<8xf32>
      %54 = vector.shape_cast %53 : vector<8xf32> to vector<8x1xf32>
      %cst_27 = arith.constant 1.440000e+02 : f32
      %55 = vector.broadcast %cst_27 : f32 to vector<8x1xf32>
      %56 = arith.divf %54, %55 : vector<8x1xf32>
      %cst_28 = arith.constant 9.99999974E-6 : f32
      %57 = vector.broadcast %cst_28 : f32 to vector<8x1xf32>
      %58 = arith.addf %56, %57 : vector<8x1xf32>
      %59 = math.rsqrt %58 : vector<8x1xf32>
      %60 = vector.broadcast %59 : vector<8x1xf32> to vector<8x144xf32>
      %61 = arith.mulf %51, %60 : vector<8x144xf32>
      %62 = vector.shape_cast %1 : vector<144xf32> to vector<1x144xf32>
      %63 = vector.broadcast %62 : vector<1x144xf32> to vector<8x144xf32>
      %64 = arith.mulf %61, %63 : vector<8x144xf32>
      %65 = vector.shape_cast %3 : vector<144xf32> to vector<1x144xf32>
      %66 = vector.broadcast %65 : vector<1x144xf32> to vector<8x144xf32>
      %67 = arith.addf %64, %66 : vector<8x144xf32>
      %68 = arith.truncf %67 : vector<8x144xf32> to vector<8x144xbf16>
      %c0_29 = arith.constant 0 : index
      %c0_30 = arith.constant 0 : index
      %69 = vector.load %arg15[%c0_29, %c0_30] : memref<8x144xbf16, #tpu.memory_space<vmem>>, vector<8x144xbf16>
      tpu.vector_store %arg15[%c0_29, %c0_30], %45 {strides = array<i32>} : memref<8x144xbf16, #tpu.memory_space<vmem>>, vector<8x144xbf16>,
      %c0_31 = arith.constant 0 : index
      %c0_32 = arith.constant 0 : index
      %70 = vector.load %arg16[%c0_31, %c0_32] : memref<8x144xbf16, #tpu.memory_space<vmem>>, vector<8x144xbf16>
      tpu.vector_store %arg16[%c0_31, %c0_32], %68 {strides = array<i32>} : memref<8x144xbf16, #tpu.memory_space<vmem>>, vector<8x144xbf16>,
      %c0_33 = arith.constant 0 : index
      %c0_34 = arith.constant 0 : index
      %71 = vector.load %arg9[%c0_33, %c0_34] : memref<144x144xbf16, #tpu.memory_space<vmem>>, vector<144x144xbf16>
      %c0_35 = arith.constant 0 : index
      %c0_36 = arith.constant 0 : index
      %72 = vector.load %arg10[%c0_35, %c0_36] : memref<144x144xbf16, #tpu.memory_space<vmem>>, vector<144x144xbf16>
      %c0_37 = arith.constant 0 : index
      %c0_38 = arith.constant 0 : index
      %73 = vector.load %arg11[%c0_37, %c0_38] : memref<1x144xf32, #tpu.memory_space<vmem>>, vector<1x144xf32>
      %74 = vector.shape_cast %73 : vector<1x144xf32> to vector<144xf32>
      %c0_39 = arith.constant 0 : index
      %c0_40 = arith.constant 0 : index
      %75 = vector.load %arg12[%c0_39, %c0_40] : memref<8x8xbf16, #tpu.memory_space<vmem>>, vector<8x8xbf16>
      %cst_41 = arith.constant dense<0.000000e+00> : vector<8x144xf32>
      %76 = tpu.matmul %45, %71, %cst_41 {dimension_numbers = #tpu.dot_dimension_numbers<[1], [0], [0], [1], [0, 0, 1, 1], [], []>} : vector<8x144xbf16>, vector<144x144xbf16>, vector<8x144xf32> -> vector<8x144xf32>
      %cst_42 = arith.constant dense<0.000000e+00> : vector<8x144xf32>
      %77 = tpu.matmul %75, %68, %cst_42 {dimension_numbers = #tpu.dot_dimension_numbers<[1], [0], [0], [1], [0, 0, 1, 1], [], []>} : vector<8x8xbf16>, vector<8x144xbf16>, vector<8x144xf32> -> vector<8x144xf32>
      %78 = arith.truncf %77 : vector<8x144xf32> to vector<8x144xbf16>
      %cst_43 = arith.constant dense<0.000000e+00> : vector<8x144xf32>
      %79 = tpu.matmul %78, %72, %cst_43 {dimension_numbers = #tpu.dot_dimension_numbers<[1], [0], [0], [1], [0, 0, 1, 1], [], []>} : vector<8x144xbf16>, vector<144x144xbf16>, vector<8x144xf32> -> vector<8x144xf32>
      %80 = arith.addf %76, %79 : vector<8x144xf32>
      %81 = vector.shape_cast %74 : vector<144xf32> to vector<1x144xf32>
      %82 = vector.broadcast %81 : vector<1x144xf32> to vector<8x144xf32>
      %83 = arith.addf %80, %82 : vector<8x144xf32>
      %c0_44 = arith.constant 0 : index
      %c0_45 = arith.constant 0 : index
      %c0_46 = arith.constant 0 : index
      %84 = vector.load %arg13[%c0_44, %c0_45, %c0_46] : memref<1x8x144xf32, #tpu.memory_space<vmem>>, vector<1x8x144xf32>
      %85 = vector.shape_cast %84 : vector<1x8x144xf32> to vector<8x144xf32>
      %86 = vector.shape_cast %83 : vector<8x144xf32> to vector<1x8x144xf32>
      tpu.vector_store %arg13[%c0_44, %c0_45, %c0_46], %86 {strides = array<i32>} : memref<1x8x144xf32, #tpu.memory_space<vmem>>, vector<1x8x144xf32>,
    } else {
    }
    %c1_i32 = arith.constant 1 : i32
    %7 = arith.cmpi eq, %arg2, %c1_i32 : i32
    %8 = arith.extui %7 : i1 to i32
    %c0_i32_4 = arith.constant 0 : i32
    %9 = arith.cmpi ne, %8, %c0_i32_4 : i32
    scf.if %9 {
      %c0_5 = arith.constant 0 : index
      %c0_6 = arith.constant 0 : index
      %c0_7 = arith.constant 0 : index
      %10 = vector.load %arg5[%c0_5, %c0_6, %c0_7] : memref<1x8x144xf32, #tpu.memory_space<vmem>>, vector<1x8x144xf32>
      %11 = vector.shape_cast %10 : vector<1x8x144xf32> to vector<8x144xf32>
      %c0_8 = arith.constant 0 : index
      %c0_9 = arith.constant 0 : index
      %c0_10 = arith.constant 0 : index
      %12 = vector.load %arg6[%c0_8, %c0_9, %c0_10] : memref<1x8x144xf32, #tpu.memory_space<vmem>>, vector<1x8x144xf32>
      %13 = vector.shape_cast %12 : vector<1x8x144xf32> to vector<8x144xf32>
      %14 = arith.addf %11, %13 : vector<8x144xf32>
      %c0_11 = arith.constant 0 : index
      %c0_12 = arith.constant 0 : index
      %c0_13 = arith.constant 0 : index
      %15 = vector.load %arg14[%c0_11, %c0_12, %c0_13] : memref<1x8x144xf32, #tpu.memory_space<vmem>>, vector<1x8x144xf32>
      %16 = vector.shape_cast %15 : vector<1x8x144xf32> to vector<8x144xf32>
      %17 = vector.shape_cast %14 : vector<8x144xf32> to vector<1x8x144xf32>
      tpu.vector_store %arg14[%c0_11, %c0_12, %c0_13], %17 {strides = array<i32>} : memref<1x8x144xf32, #tpu.memory_space<vmem>>, vector<1x8x144xf32>,
      %c0_14 = arith.constant 0 : index
      %c0_15 = arith.constant 0 : index
      %18 = vector.load %arg16[%c0_14, %c0_15] : memref<8x144xbf16, #tpu.memory_space<vmem>>, vector<8x144xbf16>
      %c0_16 = arith.constant 0 : index
      %c0_17 = arith.constant 0 : index
      %19 = vector.load %arg15[%c0_16, %c0_17] : memref<8x144xbf16, #tpu.memory_space<vmem>>, vector<8x144xbf16>
      %c0_18 = arith.constant 0 : index
      %c0_19 = arith.constant 0 : index
      %20 = vector.load %arg9[%c0_18, %c0_19] : memref<144x144xbf16, #tpu.memory_space<vmem>>, vector<144x144xbf16>
      %c0_20 = arith.constant 0 : index
      %c0_21 = arith.constant 0 : index
      %21 = vector.load %arg10[%c0_20, %c0_21] : memref<144x144xbf16, #tpu.memory_space<vmem>>, vector<144x144xbf16>
      %c0_22 = arith.constant 0 : index
      %c0_23 = arith.constant 0 : index
      %22 = vector.load %arg11[%c0_22, %c0_23] : memref<1x144xf32, #tpu.memory_space<vmem>>, vector<1x144xf32>
      %23 = vector.shape_cast %22 : vector<1x144xf32> to vector<144xf32>
      %c0_24 = arith.constant 0 : index
      %c0_25 = arith.constant 0 : index
      %24 = vector.load %arg12[%c0_24, %c0_25] : memref<8x8xbf16, #tpu.memory_space<vmem>>, vector<8x8xbf16>
      %cst = arith.constant dense<0.000000e+00> : vector<8x144xf32>
      %25 = tpu.matmul %18, %20, %cst {dimension_numbers = #tpu.dot_dimension_numbers<[1], [0], [0], [1], [0, 0, 1, 1], [], []>} : vector<8x144xbf16>, vector<144x144xbf16>, vector<8x144xf32> -> vector<8x144xf32>
      %cst_26 = arith.constant dense<0.000000e+00> : vector<8x144xf32>
      %26 = tpu.matmul %24, %19, %cst_26 {dimension_numbers = #tpu.dot_dimension_numbers<[1], [0], [0], [1], [0, 0, 1, 1], [], []>} : vector<8x8xbf16>, vector<8x144xbf16>, vector<8x144xf32> -> vector<8x144xf32>
      %27 = arith.truncf %26 : vector<8x144xf32> to vector<8x144xbf16>
      %cst_27 = arith.constant dense<0.000000e+00> : vector<8x144xf32>
      %28 = tpu.matmul %27, %21, %cst_27 {dimension_numbers = #tpu.dot_dimension_numbers<[1], [0], [0], [1], [0, 0, 1, 1], [], []>} : vector<8x144xbf16>, vector<144x144xbf16>, vector<8x144xf32> -> vector<8x144xf32>
      %29 = arith.addf %25, %28 : vector<8x144xf32>
      %30 = vector.shape_cast %23 : vector<144xf32> to vector<1x144xf32>
      %31 = vector.broadcast %30 : vector<1x144xf32> to vector<8x144xf32>
      %32 = arith.addf %29, %31 : vector<8x144xf32>
      %c0_28 = arith.constant 0 : index
      %c0_29 = arith.constant 0 : index
      %c0_30 = arith.constant 0 : index
      %33 = vector.load %arg13[%c0_28, %c0_29, %c0_30] : memref<1x8x144xf32, #tpu.memory_space<vmem>>, vector<1x8x144xf32>
      %34 = vector.shape_cast %33 : vector<1x8x144xf32> to vector<8x144xf32>
      %35 = vector.shape_cast %32 : vector<8x144xf32> to vector<1x8x144xf32>
      tpu.vector_store %arg13[%c0_28, %c0_29, %c0_30], %35 {strides = array<i32>} : memref<1x8x144xf32, #tpu.memory_space<vmem>>, vector<1x8x144xf32>,
    } else {
    }
    return
  }
  func.func @transform_0(%arg0: i32, %arg1: i32, %arg2: i32) -> (i32, i32, i32) {
    %c0_i32 = arith.constant 0 : i32
    %c0_i32_0 = arith.constant 0 : i32
    return %arg0, %arg1, %c0_i32 : i32, i32, i32
  }
  func.func @transform_1(%arg0: i32, %arg1: i32, %arg2: i32) -> (i32, i32, i32) {
    %c0_i32 = arith.constant 0 : i32
    %c0_i32_0 = arith.constant 0 : i32
    return %arg0, %arg1, %c0_i32 : i32, i32, i32
  }
  func.func @transform_2(%arg0: i32, %arg1: i32, %arg2: i32) -> (i32, i32, i32) {
    %c0_i32 = arith.constant 0 : i32
    %0 = arith.subi %c0_i32, %arg1 : i32
    %c0_i32_0 = arith.constant 0 : i32
    %c0_i32_1 = arith.constant 0 : i32
    return %arg0, %0, %c0_i32_0 : i32, i32, i32
  }
  func.func @transform_3(%arg0: i32, %arg1: i32, %arg2: i32) -> (i32, i32, i32) {
    %c0_i32 = arith.constant 0 : i32
    %0 = arith.subi %c0_i32, %arg1 : i32
    %c0_i32_0 = arith.constant 0 : i32
    %c0_i32_1 = arith.constant 0 : i32
    return %arg0, %0, %c0_i32_0 : i32, i32, i32
  }
  func.func @transform_4(%arg0: i32, %arg1: i32, %arg2: i32) -> (i32, i32) {
    %c0_i32 = arith.constant 0 : i32
    %c0_i32_0 = arith.constant 0 : i32
    %c0_i32_1 = arith.constant 0 : i32
    return %c0_i32, %c0_i32_0 : i32, i32
  }
  func.func @transform_5(%arg0: i32, %arg1: i32, %arg2: i32) -> (i32, i32) {
    %c0_i32 = arith.constant 0 : i32
    %c0_i32_0 = arith.constant 0 : i32
    %c0_i32_1 = arith.constant 0 : i32
    return %c0_i32, %c0_i32_0 : i32, i32
  }
  func.func @transform_6(%arg0: i32, %arg1: i32, %arg2: i32) -> (i32, i32) {
    %c0_i32 = arith.constant 0 : i32
    %c0_i32_0 = arith.constant 0 : i32
    %c0_i32_1 = arith.constant 0 : i32
    return %c0_i32, %c0_i32_0 : i32, i32
  }
  func.func @transform_7(%arg0: i32, %arg1: i32, %arg2: i32) -> (i32, i32) {
    %c0_i32 = arith.constant 0 : i32
    %c0_i32_0 = arith.constant 0 : i32
    %c0_i32_1 = arith.constant 0 : i32
    return %c0_i32, %c0_i32_0 : i32, i32
  }
  func.func @transform_8(%arg0: i32, %arg1: i32, %arg2: i32) -> (i32, i32) {
    %c0_i32 = arith.constant 0 : i32
    %c0_i32_0 = arith.constant 0 : i32
    %c0_i32_1 = arith.constant 0 : i32
    return %c0_i32, %c0_i32_0 : i32, i32
  }
  func.func @transform_9(%arg0: i32, %arg1: i32, %arg2: i32) -> (i32, i32) {
    %c0_i32 = arith.constant 0 : i32
    %c0_i32_0 = arith.constant 0 : i32
    %c0_i32_1 = arith.constant 0 : i32
    return %c0_i32, %c0_i32_0 : i32, i32
  }
  func.func @transform_10(%arg0: i32, %arg1: i32, %arg2: i32) -> (i32, i32, i32) {
    %c2_i32 = arith.constant 2 : i32
    %0 = arith.muli %c2_i32, %arg1 : i32
    %c0_i32 = arith.constant 0 : i32
    %1 = arith.subi %c0_i32, %0 : i32
    %2 = arith.muli %arg2, %1 : i32
    %3 = arith.addi %arg1, %2 : i32
    %c0_i32_0 = arith.constant 0 : i32
    %c0_i32_1 = arith.constant 0 : i32
    return %arg0, %3, %c0_i32_0 : i32, i32, i32
  }
  func.func @transform_11(%arg0: i32, %arg1: i32, %arg2: i32) -> (i32, i32, i32) {
    %c2_i32 = arith.constant 2 : i32
    %0 = arith.muli %c2_i32, %arg1 : i32
    %c0_i32 = arith.constant 0 : i32
    %1 = arith.subi %c0_i32, %0 : i32
    %2 = arith.muli %arg2, %1 : i32
    %3 = arith.addi %arg1, %2 : i32
    %c0_i32_0 = arith.constant 0 : i32
    %c0_i32_1 = arith.constant 0 : i32
    return %arg0, %3, %c0_i32_0 : i32, i32, i32
  }
}

</mosaic_0001>

<llo_original>
// kernel: tpu_custom_call.1
$region0: #{tpu_custom_call.1}
  #allocation0 [shape = 'u32[]', space=smem, size = 0x4, offset = 0x4, fixed_abs, tag = 'smem constant byte address 0x4 - core index']
  #allocation1 [shape = 'u32[144,128]{1,0:T(1,128)}', space=vmem, size = 0x12000, scoped, tag = 'internal scratch']
  #allocation2 [shape = 'bf16[8,144]{1,0:T(8,128)(2,1)}', space=vmem, size = 0x1000, scoped, tag = 'scratch operand']
  #allocation3 [shape = 'bf16[8,144]{1,0:T(8,128)(2,1)}', space=vmem, size = 0x1000, scoped, tag = 'scratch operand']
  %s0 = inlined_call_operand.hbm [shape: f32[2,8,144], index: 0, kind: input, shape index: {}]
  %s1 = inlined_call_operand.hbm [shape: f32[2,8,144], index: 1, kind: input, shape index: {}]
  %s2 = inlined_call_operand.hbm [shape: f32[2,8,144], index: 2, kind: input, shape index: {}]
  %s3 = inlined_call_operand.hbm [shape: f32[2,8,144], index: 3, kind: input, shape index: {}]
  %s4 = inlined_call_operand.vmem [shape: f32[1,144], index: 4, kind: input, shape index: {}]
  %s5 = inlined_call_operand.vmem [shape: f32[1,144], index: 5, kind: input, shape index: {}]
  %s6 = inlined_call_operand.hbm [shape: bf16[144,144], index: 6, kind: input, shape index: {}]
  %s7 = inlined_call_operand.hbm [shape: bf16[144,144], index: 7, kind: input, shape index: {}]
  %s8 = inlined_call_operand.vmem [shape: f32[1,144], index: 8, kind: input, shape index: {}]
  %s9 = inlined_call_operand.vmem [shape: bf16[8,8], index: 9, kind: input, shape index: {}]
  %s10 = inlined_call_operand.hbm [shape: f32[2,8,144], index: 10, kind: output, shape index: {0}]
  %s11 = inlined_call_operand.hbm [shape: f32[2,8,144], index: 11, kind: output, shape index: {1}]
  %12 = xla_tuple %s10, %s11
  %s13 = sld [smem:[#allocation0]]
  $region113: #{tpu_custom_call.1} parent=0
    _
  %s15 = ssub.s32 1, %s13
  %s16 = scalar_select 0, %s15, %s13
  $region1: #{tpu_custom_call.1} parent=0
    #allocation4 [shape = 'u8[16384]{0}', space=vmem, size = 0x4000, scoped, tag = 'input window, operand 0']
    #allocation5 [shape = 's32[2]{0}', space=sflag, size = 0x8, scoped, tag = 'scoped memory for tpu_custom_call.1']
    #allocation6 [shape = 's32[2]{0}', space=sflag, size = 0x8, scoped, tag = 'scoped memory for tpu_custom_call.1']
    #allocation7 [shape = 'u8[16384]{0}', space=vmem, size = 0x4000, scoped, tag = 'input window, operand 1']
    #allocation8 [shape = 's32[2]{0}', space=sflag, size = 0x8, scoped, tag = 'scoped memory for tpu_custom_call.1']
    #allocation9 [shape = 'u8[16384]{0}', space=vmem, size = 0x4000, scoped, tag = 'input window, operand 2']
    #allocation10 [shape = 'u8[16384]{0}', space=vmem, size = 0x4000, scoped, tag = 'input window, operand 3']
    #allocation11 [shape = 's32[2]{0}', space=sflag, size = 0x8, scoped, tag = 'scoped memory for tpu_custom_call.1']
    #allocation12 [shape = 'u8[73728]{0}', space=vmem, size = 0x12000, scoped, tag = 'input window, operand 6, single buffered']
    #allocation13 [shape = 'u8[73728]{0}', space=vmem, size = 0x12000, scoped, tag = 'input window, operand 7, single buffered']
    #allocation14 [shape = 's32[1]{0}', space=sflag, size = 0x4, scoped, tag = 'scoped memory for tpu_custom_call.1']
    #allocation15 [shape = 'u8[16384]{0}', space=vmem, size = 0x4000, scoped, tag = 'output window, operand 0']
    #allocation16 [shape = 'u8[16384]{0}', space=vmem, size = 0x4000, scoped, tag = 'output window, operand 1']
    #allocation17 [shape = 's32[2]{0}', space=sflag, size = 0x8, scoped, tag = 'scoped memory for tpu_custom_call.1']
    %17 = vsyncpa [#allocation5], 0
    %s18 = scalar_lea.sflag [#allocation5], 1
    %19 = vsyncpa %s18, 0
    %20 = vsyncpa [#allocation8], 0
    %s21 = scalar_lea.sflag [#allocation8], 1
    %22 = vsyncpa %s21, 0
    %23 = vsyncpa [#allocation11], 0
    %s24 = scalar_lea.sflag [#allocation11], 1
    %25 = vsyncpa %s24, 0
    %26 = vsyncpa [#allocation14], 0
    %27 = vsyncpa [#allocation6], 0
    %s28 = scalar_lea.sflag [#allocation6], 1
    %29 = vsyncpa %s28, 0
    %30 = vsyncpa [#allocation17], 0
    %s31 = scalar_lea.sflag [#allocation17], 1
    %32 = vsyncpa %s31, 0
    loop: start=0, step=1, limit=6
    $region2: #{tpu_custom_call.1} parent=1 // loop_pre_header
      _
    $region3: #{tpu_custom_call.1} parent=1 // loop_header
      %s34 = sphi 0, %s38
      %p35 = scmp.ge.s32.totalorder %s34, 6
      %s41 = sphi 0, %s60
      %s42 = sphi 0, %s56
      %s43 = sphi 0, %s52
      %s44 = sphi 0, %s41
      %s45 = sphi 0, %s42
      %s46 = sphi 0, %s43
      %s47 = sphi 0, %s44
      %s48 = sphi 0, %s45
      %s49 = sphi 0, %s46
      %s65 = sphi 0, %s67
      %s68 = sphi 0, %s65
      %s69 = sphi 0, %s68
      %s85 = sphi 0, %s69
      %s93 = sphi 0, %s95
      %s96 = sphi 0, %s93
      %s97 = sphi 0, %s96
      %s113 = sphi 0, %s97
      %s123 = sphi 0, %s125
      %s126 = sphi 0, %s123
      %s127 = sphi 0, %s126
      %s143 = sphi 0, %s127
      %s153 = sphi 0, %s155
      %s156 = sphi 0, %s153
      %s157 = sphi 0, %s156
      %s173 = sphi 0, %s157
      %s177 = sphi 0, %s177
      %s179 = sphi 0, %s177
      %s180 = sphi 0, %s179
      %s194 = sphi 0, %s180
      %s198 = sphi 0, %s198
      %s200 = sphi 0, %s198
      %s201 = sphi 0, %s200
      %s215 = sphi 0, %s201
      %s219 = sphi 0, %s219
      %s221 = sphi 0, %s219
      %s222 = sphi 0, %s221
      %s236 = sphi 0, %s222
      %s240 = sphi 0, %s240
      %s242 = sphi 0, %s240
      %s243 = sphi 0, %s242
      %s257 = sphi 0, %s243
      %s261 = sphi 0, %s261
      %s263 = sphi 0, %s261
      %s264 = sphi 0, %s263
      %s278 = sphi 0, %s264
      %s282 = sphi 0, %s282
      %s284 = sphi 0, %s282
      %s285 = sphi 0, %s284
      %s299 = sphi 0, %s285
      %s315 = sphi 0, %s317
      %s318 = sphi 0, %s315
      %s319 = sphi 0, %s318
      %s335 = sphi 0, %s319
      %s351 = sphi 0, %s353
      %s354 = sphi 0, %s351
      %s355 = sphi 0, %s354
      %s371 = sphi 0, %s355
    $region4: #{tpu_custom_call.1} parent=1 // loop_header_branch
      %37 = sbr.rel (%p35) target = $region8
    $region5: #{tpu_custom_call.1} parent=1 // loop_body
      %s39 = ssub.s32 %s34, 1
      %s40 = ssub.s32 %s34, 2
      %s50 = sadd.s32 1, %s43
      %p51 = scmp.ge.s32.totalorder %s50, 2
      %s52 = scalar_select %p51, 0, %s50
      %s53 = sadd.s32 1, %s42
      %s54 = scalar_select %p51, %s53, %s42
      %p55 = scmp.ge.s32.totalorder %s54, 1
      %s56 = scalar_select %p55, 0, %s54
      %s57 = sadd.s32 1, %s41
      %s58 = scalar_select %p55, %s57, %s41
      %p59 = scmp.ge.s32.totalorder %s58, 2
      %s60 = scalar_select %p59, 0, %s58
      %s61 = ssub.s32 %s41, %s60
      %s62 = ssub.s32 %s42, %s56
      %s63 = sor.u32 %s61, %s62
      %p64 = scmp.eq.s32.totalorder %s63, 0
      %s66 = sadd.s32 %s65, 1
      %s67 = scalar_select %p64, %s65, %s66
      %p70 = pneg %p64
      %p71 = scmp.eq.s32.totalorder %s34, 3
      %p72 = por %p70, %p71
      %p73 = scmp.ne.s32.totalorder %s65, %s68
      %p74 = scmp.eq.s32.totalorder %s34, 0
      %p75 = por %p73, %p74
      %p76 = scmp.ne.s32.totalorder %s65, %s68
      %p77 = scmp.eq.s32.totalorder %s39, 3
      %p78 = por %p76, %p77
      %p79 = scmp.ne.s32.totalorder %s68, %s69
      %p80 = scmp.eq.s32.totalorder %s39, 0
      %p81 = por %p79, %p80
      %p82 = scmp.ne.s32.totalorder %s68, %s69
      %p83 = scmp.eq.s32.totalorder %s40, 3
      %p84 = por %p82, %p83
      %p86 = scmp.ne.s32.totalorder %s69, %s85
      %p87 = scmp.eq.s32.totalorder %s40, 0
      %p88 = por %p86, %p87
      %s89 = ssub.s32 %s41, %s60
      %s90 = ssub.s32 %s42, %s56
      %s91 = sor.u32 %s89, %s90
      %p92 = scmp.eq.s32.totalorder %s91, 0
      %s94 = sadd.s32 %s93, 1
      %s95 = scalar_select %p92, %s93, %s94
      %p98 = pneg %p92
      %p99 = scmp.eq.s32.totalorder %s34, 3
      %p100 = por %p98, %p99
      %p101 = scmp.ne.s32.totalorder %s93, %s96
      %p102 = scmp.eq.s32.totalorder %s34, 0
      %p103 = por %p101, %p102
      %p104 = scmp.ne.s32.totalorder %s93, %s96
      %p105 = scmp.eq.s32.totalorder %s39, 3
      %p106 = por %p104, %p105
      %p107 = scmp.ne.s32.totalorder %s96, %s97
      %p108 = scmp.eq.s32.totalorder %s39, 0
      %p109 = por %p107, %p108
      %p110 = scmp.ne.s32.totalorder %s96, %s97
      %p111 = scmp.eq.s32.totalorder %s40, 3
      %p112 = por %p110, %p111
      %p114 = scmp.ne.s32.totalorder %s97, %s113
      %p115 = scmp.eq.s32.totalorder %s40, 0
      %p116 = por %p114, %p115
      %s117 = ssub.s32 0, %s42
      %s118 = ssub.s32 0, %s56
      %s119 = ssub.s32 %s41, %s60
      %s120 = ssub.s32 %s117, %s118
      %s121 = sor.u32 %s119, %s120
      %p122 = scmp.eq.s32.totalorder %s121, 0
      %s124 = sadd.s32 %s123, 1
      %s125 = scalar_select %p122, %s123, %s124
      %p128 = pneg %p122
      %p129 = scmp.eq.s32.totalorder %s34, 3
      %p130 = por %p128, %p129
      %p131 = scmp.ne.s32.totalorder %s123, %s126
      %p132 = scmp.eq.s32.totalorder %s34, 0
      %p133 = por %p131, %p132
      %p134 = scmp.ne.s32.totalorder %s123, %s126
      %p135 = scmp.eq.s32.totalorder %s39, 3
      %p136 = por %p134, %p135
      %p137 = scmp.ne.s32.totalorder %s126, %s127
      %p138 = scmp.eq.s32.totalorder %s39, 0
      %p139 = por %p137, %p138
      %p140 = scmp.ne.s32.totalorder %s126, %s127
      %p141 = scmp.eq.s32.totalorder %s40, 3
      %p142 = por %p140, %p141
      %p144 = scmp.ne.s32.totalorder %s127, %s143
      %p145 = scmp.eq.s32.totalorder %s40, 0
      %p146 = por %p144, %p145
      %s147 = ssub.s32 0, %s42
      %s148 = ssub.s32 0, %s56
      %s149 = ssub.s32 %s41, %s60
      %s150 = ssub.s32 %s147, %s148
      %s151 = sor.u32 %s149, %s150
      %p152 = scmp.eq.s32.totalorder %s151, 0
      %s154 = sadd.s32 %s153, 1
      %s155 = scalar_select %p152, %s153, %s154
      %p158 = pneg %p152
      %p159 = scmp.eq.s32.totalorder %s34, 3
      %p160 = por %p158, %p159
      %p161 = scmp.ne.s32.totalorder %s153, %s156
      %p162 = scmp.eq.s32.totalorder %s34, 0
      %p163 = por %p161, %p162
      %p164 = scmp.ne.s32.totalorder %s153, %s156
      %p165 = scmp.eq.s32.totalorder %s39, 3
      %p166 = por %p164, %p165
      %p167 = scmp.ne.s32.totalorder %s156, %s157
      %p168 = scmp.eq.s32.totalorder %s39, 0
      %p169 = por %p167, %p168
      %p170 = scmp.ne.s32.totalorder %s156, %s157
      %p171 = scmp.eq.s32.totalorder %s40, 3
      %p172 = por %p170, %p171
      %p174 = scmp.ne.s32.totalorder %s157, %s173
      %p175 = scmp.eq.s32.totalorder %s40, 0
      %p176 = por %p174, %p175
      %s178 = sadd.s32 %s177, 1
      %p181 = scmp.eq.s32.totalorder %s34, 3
      %p182 = scmp.ne.s32.totalorder %s177, %s179
      %p183 = scmp.eq.s32.totalorder %s34, 0
      %p184 = por %p182, %p183
      %p185 = scmp.ne.s32.totalorder %s177, %s179
      %p186 = scmp.eq.s32.totalorder %s39, 3
      %p187 = por %p185, %p186
      %p188 = scmp.ne.s32.totalorder %s179, %s180
      %p189 = scmp.eq.s32.totalorder %s39, 0
      %p190 = por %p188, %p189
      %p191 = scmp.ne.s32.totalorder %s179, %s180
      %p192 = scmp.eq.s32.totalorder %s40, 3
      %p193 = por %p191, %p192
      %p195 = scmp.ne.s32.totalorder %s180, %s194
      %p196 = scmp.eq.s32.totalorder %s40, 0
      %p197 = por %p195, %p196
      %s199 = sadd.s32 %s198, 1
      %p202 = scmp.eq.s32.totalorder %s34, 3
      %p203 = scmp.ne.s32.totalorder %s198, %s200
      %p204 = scmp.eq.s32.totalorder %s34, 0
      %p205 = por %p203, %p204
      %p206 = scmp.ne.s32.totalorder %s198, %s200
      %p207 = scmp.eq.s32.totalorder %s39, 3
      %p208 = por %p206, %p207
      %p209 = scmp.ne.s32.totalorder %s200, %s201
      %p210 = scmp.eq.s32.totalorder %s39, 0
      %p211 = por %p209, %p210
      %p212 = scmp.ne.s32.totalorder %s200, %s201
      %p213 = scmp.eq.s32.totalorder %s40, 3
      %p214 = por %p212, %p213
      %p216 = scmp.ne.s32.totalorder %s201, %s215
      %p217 = scmp.eq.s32.totalorder %s40, 0
      %p218 = por %p216, %p217
      %s220 = sadd.s32 %s219, 1
      %p223 = scmp.eq.s32.totalorder %s34, 3
      %p224 = scmp.ne.s32.totalorder %s219, %s221
      %p225 = scmp.eq.s32.totalorder %s34, 0
      %p226 = por %p224, %p225
      %p227 = scmp.ne.s32.totalorder %s219, %s221
      %p228 = scmp.eq.s32.totalorder %s39, 3
      %p229 = por %p227, %p228
      %p230 = scmp.ne.s32.totalorder %s221, %s222
      %p231 = scmp.eq.s32.totalorder %s39, 0
      %p232 = por %p230, %p231
      %p233 = scmp.ne.s32.totalorder %s221, %s222
      %p234 = scmp.eq.s32.totalorder %s40, 3
      %p235 = por %p233, %p234
      %p237 = scmp.ne.s32.totalorder %s222, %s236
      %p238 = scmp.eq.s32.totalorder %s40, 0
      %p239 = por %p237, %p238
      %s241 = sadd.s32 %s240, 1
      %p244 = scmp.eq.s32.totalorder %s34, 3
      %p245 = scmp.ne.s32.totalorder %s240, %s242
      %p246 = scmp.eq.s32.totalorder %s34, 0
      %p247 = por %p245, %p246
      %p248 = scmp.ne.s32.totalorder %s240, %s242
      %p249 = scmp.eq.s32.totalorder %s39, 3
      %p250 = por %p248, %p249
      %p251 = scmp.ne.s32.totalorder %s242, %s243
      %p252 = scmp.eq.s32.totalorder %s39, 0
      %p253 = por %p251, %p252
      %p254 = scmp.ne.s32.totalorder %s242, %s243
      %p255 = scmp.eq.s32.totalorder %s40, 3
      %p256 = por %p254, %p255
      %p258 = scmp.ne.s32.totalorder %s243, %s257
      %p259 = scmp.eq.s32.totalorder %s40, 0
      %p260 = por %p258, %p259
      %s262 = sadd.s32 %s261, 1
      %p265 = scmp.eq.s32.totalorder %s34, 3
      %p266 = scmp.ne.s32.totalorder %s261, %s263
      %p267 = scmp.eq.s32.totalorder %s34, 0
      %p268 = por %p266, %p267
      %p269 = scmp.ne.s32.totalorder %s261, %s263
      %p270 = scmp.eq.s32.totalorder %s39, 3
      %p271 = por %p269, %p270
      %p272 = scmp.ne.s32.totalorder %s263, %s264
      %p273 = scmp.eq.s32.totalorder %s39, 0
      %p274 = por %p272, %p273
      %p275 = scmp.ne.s32.totalorder %s263, %s264
      %p276 = scmp.eq.s32.totalorder %s40, 3
      %p277 = por %p275, %p276
      %p279 = scmp.ne.s32.totalorder %s264, %s278
      %p280 = scmp.eq.s32.totalorder %s40, 0
      %p281 = por %p279, %p280
      %s283 = sadd.s32 %s282, 1
      %p286 = scmp.eq.s32.totalorder %s34, 3
      %p287 = scmp.ne.s32.totalorder %s282, %s284
      %p288 = scmp.eq.s32.totalorder %s34, 0
      %p289 = por %p287, %p288
      %p290 = scmp.ne.s32.totalorder %s282, %s284
      %p291 = scmp.eq.s32.totalorder %s39, 3
      %p292 = por %p290, %p291
      %p293 = scmp.ne.s32.totalorder %s284, %s285
      %p294 = scmp.eq.s32.totalorder %s39, 0
      %p295 = por %p293, %p294
      %p296 = scmp.ne.s32.totalorder %s284, %s285
      %p297 = scmp.eq.s32.totalorder %s40, 3
      %p298 = por %p296, %p297
      %p300 = scmp.ne.s32.totalorder %s285, %s299
      %p301 = scmp.eq.s32.totalorder %s40, 0
      %p302 = por %p300, %p301
      %s303 = smul.u32 %s42, 2
      %s304 = ssub.s32 0, %s303
      %s305 = smul.u32 %s43, %s304
      %s306 = sadd.s32 %s42, %s305
      %s307 = smul.u32 %s56, 2
      %s308 = ssub.s32 0, %s307
      %s309 = smul.u32 %s52, %s308
      %s310 = sadd.s32 %s56, %s309
      %s311 = ssub.s32 %s41, %s60
      %s312 = ssub.s32 %s306, %s310
      %s313 = sor.u32 %s311, %s312
      %p314 = scmp.eq.s32.totalorder %s313, 0
      %s316 = sadd.s32 %s315, 1
      %s317 = scalar_select %p314, %s315, %s316
      %p320 = pneg %p314
      %p321 = scmp.eq.s32.totalorder %s34, 3
      %p322 = por %p320, %p321
      %p323 = scmp.ne.s32.totalorder %s315, %s318
      %p324 = scmp.eq.s32.totalorder %s34, 0
      %p325 = por %p323, %p324
      %p326 = scmp.ne.s32.totalorder %s315, %s318
      %p327 = scmp.eq.s32.totalorder %s39, 3
      %p328 = por %p326, %p327
      %p329 = scmp.ne.s32.totalorder %s318, %s319
      %p330 = scmp.eq.s32.totalorder %s39, 0
      %p331 = por %p329, %p330
      %p332 = scmp.ne.s32.totalorder %s318, %s319
      %p333 = scmp.eq.s32.totalorder %s40, 3
      %p334 = por %p332, %p333
      %p336 = scmp.ne.s32.totalorder %s319, %s335
      %p337 = scmp.eq.s32.totalorder %s40, 0
      %p338 = por %p336, %p337
      %s339 = smul.u32 %s42, 2
      %s340 = ssub.s32 0, %s339
      %s341 = smul.u32 %s43, %s340
      %s342 = sadd.s32 %s42, %s341
      %s343 = smul.u32 %s56, 2
      %s344 = ssub.s32 0, %s343
      %s345 = smul.u32 %s52, %s344
      %s346 = sadd.s32 %s56, %s345
      %s347 = ssub.s32 %s41, %s60
      %s348 = ssub.s32 %s342, %s346
      %s349 = sor.u32 %s347, %s348
      %p350 = scmp.eq.s32.totalorder %s349, 0
      %s352 = sadd.s32 %s351, 1
      %s353 = scalar_select %p350, %s351, %s352
      %p356 = pneg %p350
      %p357 = scmp.eq.s32.totalorder %s34, 3
      %p358 = por %p356, %p357
      %p359 = scmp.ne.s32.totalorder %s351, %s354
      %p360 = scmp.eq.s32.totalorder %s34, 0
      %p361 = por %p359, %p360
      %p362 = scmp.ne.s32.totalorder %s351, %s354
      %p363 = scmp.eq.s32.totalorder %s39, 3
      %p364 = por %p362, %p363
      %p365 = scmp.ne.s32.totalorder %s354, %s355
      %p366 = scmp.eq.s32.totalorder %s39, 0
      %p367 = por %p365, %p366
      %p368 = scmp.ne.s32.totalorder %s354, %s355
      %p369 = scmp.eq.s32.totalorder %s40, 3
      %p370 = por %p368, %p369
      %p372 = scmp.ne.s32.totalorder %s355, %s371
      %p373 = scmp.eq.s32.totalorder %s40, 0
      %p374 = por %p372, %p373
      %p375 = scmp.le.s32.totalorder 1, %s34
      %p376 = scmp.lt.s32.totalorder %s34, 5
      %p377 = pnand %p375, %p376
      %p378 = pneg %p377
      // Predicated region
      $region9: #{tpu_custom_call.1} parent=5 // pred_check
        _
      $region10: #{tpu_custom_call.1} parent=5 // pred_check_branch
        %380 = sbr.rel (%p377) target = $region12
      $region11: #{tpu_custom_call.1} parent=5 // pred_region
        %s381 = ssub.s32 %s34, 1
        // Predicated region
        $region13: #{tpu_custom_call.1} parent=11 // pred_check
          %p382 = pneg %p190
        $region14: #{tpu_custom_call.1} parent=11 // pred_check_branch
          %384 = sbr.rel (%p382) target = $region16
        $region15: #{tpu_custom_call.1} parent=11 // pred_region
          _
        $region16: #{tpu_custom_call.1} parent=11 // pred_fallthru
          _
        // Predicated region
        $region17: #{tpu_custom_call.1} parent=11 // pred_check
          %p385 = pneg %p211
        $region18: #{tpu_custom_call.1} parent=11 // pred_check_branch
          %387 = sbr.rel (%p385) target = $region20
        $region19: #{tpu_custom_call.1} parent=11 // pred_region
          _
        $region20: #{tpu_custom_call.1} parent=11 // pred_fallthru
          _
        // Predicated region
        $region21: #{tpu_custom_call.1} parent=11 // pred_check
          %p388 = pneg %p232
        $region22: #{tpu_custom_call.1} parent=11 // pred_check_branch
          %390 = sbr.rel (%p388) target = $region24
        $region23: #{tpu_custom_call.1} parent=11 // pred_region
          %s392 = ssub.s32 2304, 2304
          %393 = vsyncadd [#allocation11], %s392
          %s394 = sshll.u32 [#allocation12], 4
          %s395 = int_to_ptr.vmem [resolvable:$true] %s394
          %400 = dma.hbm_to_vmem [thread:$0]  %s6, 2304, %s395, [#allocation11], 128, 128, 8
        $region24: #{tpu_custom_call.1} parent=11 // pred_fallthru
          _
        // Predicated region
        $region25: #{tpu_custom_call.1} parent=11 // pred_check
          %p401 = pneg %p253
        $region26: #{tpu_custom_call.1} parent=11 // pred_check_branch
          %403 = sbr.rel (%p401) target = $region28
        $region27: #{tpu_custom_call.1} parent=11 // pred_region
          %s405 = ssub.s32 2304, 2304
          %406 = vsyncadd [#allocation14], %s405
          %s407 = sshll.u32 [#allocation13], 4
          %s408 = int_to_ptr.vmem [resolvable:$true] %s407
          %413 = dma.hbm_to_vmem [thread:$0]  %s7, 2304, %s408, [#allocation14], 128, 128, 8
        $region28: #{tpu_custom_call.1} parent=11 // pred_fallthru
          _
        // Predicated region
        $region29: #{tpu_custom_call.1} parent=11 // pred_check
          %p414 = pneg %p274
        $region30: #{tpu_custom_call.1} parent=11 // pred_check_branch
          %416 = sbr.rel (%p414) target = $region32
        $region31: #{tpu_custom_call.1} parent=11 // pred_region
          _
        $region32: #{tpu_custom_call.1} parent=11 // pred_fallthru
          _
        // Predicated region
        $region33: #{tpu_custom_call.1} parent=11 // pred_check
          %p417 = pneg %p295
        $region34: #{tpu_custom_call.1} parent=11 // pred_check_branch
          %419 = sbr.rel (%p417) target = $region36
        $region35: #{tpu_custom_call.1} parent=11 // pred_region
          _
        $region36: #{tpu_custom_call.1} parent=11 // pred_fallthru
          _
      $region12: #{tpu_custom_call.1} parent=5 // pred_fallthru
        _
      %p420 = scmp.lt.s32.totalorder %s34, 4
      // Predicated region
      $region37: #{tpu_custom_call.1} parent=5 // pred_check
        %p421 = pneg %p420
      $region38: #{tpu_custom_call.1} parent=5 // pred_check_branch
        %423 = sbr.rel (%p421) target = $region40
      $region39: #{tpu_custom_call.1} parent=5 // pred_region
        // Predicated region
        $region41: #{tpu_custom_call.1} parent=39 // pred_check
          %p424 = pneg %p75
        $region42: #{tpu_custom_call.1} parent=39 // pred_check_branch
          %426 = sbr.rel (%p424) target = $region44
        $region43: #{tpu_custom_call.1} parent=39 // pred_region
          %s427 = sand.u32 %s65, 1
          %s428 = scalar_lea.sflag [#allocation5], %s427
          %s429 = sand.u32 %s65, 1
          %s430 = smul.addr %s429, 16
          %s431 = scalar_lea.vmem [#allocation4], %s430
          %s433 = ssub.s32 256, 256
          %434 = vsyncadd %s428, %s433
          %s435 = smul.addr %s42, 2
          %s436 = smul.addr %s41, 2
          %s437 = sadd.s32 %s435, %s436
          %s438 = smul.addr %s437, 128
          %s439 = scalar_lea.hbm %s0, %s438
          %s441 = sshll.u32 %s431, 4
          %s442 = int_to_ptr.vmem [resolvable:$true] %s441
          %444 = dma.hbm_to_vmem [thread:$0]  %s439, 256, %s442, %s428
        $region44: #{tpu_custom_call.1} parent=39 // pred_fallthru
          _
        // Predicated region
        $region45: #{tpu_custom_call.1} parent=39 // pred_check
          %p445 = pneg %p103
        $region46: #{tpu_custom_call.1} parent=39 // pred_check_branch
          %447 = sbr.rel (%p445) target = $region48
        $region47: #{tpu_custom_call.1} parent=39 // pred_region
          %s448 = sand.u32 %s34, 1
          %s449 = scalar_lea.sflag [#allocation8], %s448
          %s450 = sand.u32 %s93, 1
          %s451 = smul.addr %s450, 16
          %s452 = scalar_lea.vmem [#allocation7], %s451
          %s454 = ssub.s32 256, 256
          %455 = vsyncadd %s449, %s454
          %s456 = smul.addr %s42, 2
          %s457 = smul.addr %s41, 2
          %s458 = sadd.s32 %s456, %s457
          %s459 = smul.addr %s458, 128
          %s460 = scalar_lea.hbm %s1, %s459
          %s462 = sshll.u32 %s452, 4
          %s463 = int_to_ptr.vmem [resolvable:$true] %s462
          %465 = dma.hbm_to_vmem [thread:$0]  %s460, 256, %s463, %s449
        $region48: #{tpu_custom_call.1} parent=39 // pred_fallthru
          _
        // Predicated region
        $region49: #{tpu_custom_call.1} parent=39 // pred_check
          %p466 = pneg %p133
        $region50: #{tpu_custom_call.1} parent=39 // pred_check_branch
          %468 = sbr.rel (%p466) target = $region52
        $region51: #{tpu_custom_call.1} parent=39 // pred_region
          %s469 = sand.u32 %s34, 1
          %s470 = scalar_lea.sflag [#allocation8], %s469
          %s471 = sand.u32 %s123, 1
          %s472 = smul.addr %s471, 16
          %s473 = scalar_lea.vmem [#allocation9], %s472
          %s474 = ssub.s32 0, %s42
          %s476 = ssub.s32 256, 256
          %477 = vsyncadd %s470, %s476
          %s478 = smul.addr %s474, 2
          %s479 = smul.addr %s41, 2
          %s480 = sadd.s32 %s478, %s479
          %s481 = smul.addr %s480, 128
          %s482 = scalar_lea.hbm %s2, %s481
          %s484 = sshll.u32 %s473, 4
          %s485 = int_to_ptr.vmem [resolvable:$true] %s484
          %487 = dma.hbm_to_vmem [thread:$0]  %s482, 256, %s485, %s470
        $region52: #{tpu_custom_call.1} parent=39 // pred_fallthru
          _
        // Predicated region
        $region53: #{tpu_custom_call.1} parent=39 // pred_check
          %p488 = pneg %p163
        $region54: #{tpu_custom_call.1} parent=39 // pred_check_branch
          %490 = sbr.rel (%p488) target = $region56
        $region55: #{tpu_custom_call.1} parent=39 // pred_region
          %s491 = sand.u32 %s34, 1
          %s492 = scalar_lea.sflag [#allocation11], %s491
          %s493 = sand.u32 %s153, 1
          %s494 = smul.addr %s493, 16
          %s495 = scalar_lea.vmem [#allocation10], %s494
          %s496 = ssub.s32 0, %s42
          %s498 = ssub.s32 256, 256
          %499 = vsyncadd %s492, %s498
          %s500 = smul.addr %s496, 2
          %s501 = smul.addr %s41, 2
          %s502 = sadd.s32 %s500, %s501
          %s503 = smul.addr %s502, 128
          %s504 = scalar_lea.hbm %s3, %s503
          %s506 = sshll.u32 %s495, 4
          %s507 = int_to_ptr.vmem [resolvable:$true] %s506
          %509 = dma.hbm_to_vmem [thread:$0]  %s504, 256, %s507, %s492
        $region56: #{tpu_custom_call.1} parent=39 // pred_fallthru
          _
      $region40: #{tpu_custom_call.1} parent=5 // pred_fallthru
        _
      %p510 = scmp.le.s32.totalorder 1, %s34
      %p511 = scmp.lt.s32.totalorder %s34, 5
      %p512 = pnand %p510, %p511
      %p513 = pneg %p512
      // Predicated region
      $region57: #{tpu_custom_call.1} parent=5 // pred_check
        _
      $region58: #{tpu_custom_call.1} parent=5 // pred_check_branch
        %515 = sbr.rel (%p512) target = $region60
      $region59: #{tpu_custom_call.1} parent=5 // pred_region
        %s516 = ssub.s32 %s34, 1
        %s517 = sand.u32 %s68, 1
        %s518 = scalar_lea.sflag [#allocation5], %s517
        %s519 = sand.u32 %s68, 1
        %s520 = smul.addr %s519, 16
        %s521 = scalar_lea.vmem [#allocation4], %s520
        // Predicated region
        $region61: #{tpu_custom_call.1} parent=59 // pred_check
          %p522 = pneg %p81
        $region62: #{tpu_custom_call.1} parent=59 // pred_check_branch
          %524 = sbr.rel (%p522) target = $region64
        $region63: #{tpu_custom_call.1} parent=59 // pred_region
          %525 = dma.done %s518, 256
        $region64: #{tpu_custom_call.1} parent=59 // pred_fallthru
          _
        %s526 = sand.u32 %s39, 1
        %s527 = scalar_lea.sflag [#allocation8], %s526
        %s528 = sand.u32 %s96, 1
        %s529 = smul.addr %s528, 16
        %s530 = scalar_lea.vmem [#allocation7], %s529
        // Predicated region
        $region65: #{tpu_custom_call.1} parent=59 // pred_check
          %p531 = pneg %p109
        $region66: #{tpu_custom_call.1} parent=59 // pred_check_branch
          %533 = sbr.rel (%p531) target = $region68
        $region67: #{tpu_custom_call.1} parent=59 // pred_region
          %534 = dma.done %s527, 256
        $region68: #{tpu_custom_call.1} parent=59 // pred_fallthru
          _
        %s535 = sand.u32 %s39, 1
        %s536 = scalar_lea.sflag [#allocation8], %s535
        %s537 = sand.u32 %s126, 1
        %s538 = smul.addr %s537, 16
        %s539 = scalar_lea.vmem [#allocation9], %s538
        // Predicated region
        $region69: #{tpu_custom_call.1} parent=59 // pred_check
          %p540 = pneg %p139
        $region70: #{tpu_custom_call.1} parent=59 // pred_check_branch
          %542 = sbr.rel (%p540) target = $region72
        $region71: #{tpu_custom_call.1} parent=59 // pred_region
          %543 = dma.done %s536, 256
        $region72: #{tpu_custom_call.1} parent=59 // pred_fallthru
          _
        %s544 = sand.u32 %s39, 1
        %s545 = scalar_lea.sflag [#allocation11], %s544
        %s546 = sand.u32 %s156, 1
        %s547 = smul.addr %s546, 16
        %s548 = scalar_lea.vmem [#allocation10], %s547
        // Predicated region
        $region73: #{tpu_custom_call.1} parent=59 // pred_check
          %p549 = pneg %p169
        $region74: #{tpu_custom_call.1} parent=59 // pred_check_branch
          %551 = sbr.rel (%p549) target = $region76
        $region75: #{tpu_custom_call.1} parent=59 // pred_region
          %552 = dma.done %s545, 256
        $region76: #{tpu_custom_call.1} parent=59 // pred_fallthru
          _
        // Predicated region
        $region77: #{tpu_custom_call.1} parent=59 // pred_check
          %p553 = pneg %p232
        $region78: #{tpu_custom_call.1} parent=59 // pred_check_branch
          %555 = sbr.rel (%p553) target = $region80
        $region79: #{tpu_custom_call.1} parent=59 // pred_region
          %556 = dma.done [#allocation11], 2304
        $region80: #{tpu_custom_call.1} parent=59 // pred_fallthru
          _
        // Predicated region
        $region81: #{tpu_custom_call.1} parent=59 // pred_check
          %p557 = pneg %p253
        $region82: #{tpu_custom_call.1} parent=59 // pred_check_branch
          %559 = sbr.rel (%p557) target = $region84
        $region83: #{tpu_custom_call.1} parent=59 // pred_region
          %560 = dma.done [#allocation14], 2304
        $region84: #{tpu_custom_call.1} parent=59 // pred_fallthru
          _
        %s561 = sand.u32 %s68, 1
        %s562 = scalar_lea.sflag [#allocation5], %s561
        %s563 = sand.u32 %s68, 1
        %s564 = smul.addr %s563, 16
        %s565 = scalar_lea.vmem [#allocation4], %s564
        %p566 = pneg %p81
        %p567 = pneg %p78
        %s568 = sand.u32 %s39, 1
        %s569 = scalar_lea.sflag [#allocation8], %s568
        %s570 = sand.u32 %s96, 1
        %s571 = smul.addr %s570, 16
        %s572 = scalar_lea.vmem [#allocation7], %s571
        %p573 = pneg %p109
        %p574 = pneg %p106
        %s575 = sand.u32 %s39, 1
        %s576 = scalar_lea.sflag [#allocation8], %s575
        %s577 = sand.u32 %s126, 1
        %s578 = smul.addr %s577, 16
        %s579 = scalar_lea.vmem [#allocation9], %s578
        %p580 = pneg %p139
        %p581 = pneg %p136
        %s582 = sand.u32 %s39, 1
        %s583 = scalar_lea.sflag [#allocation11], %s582
        %s584 = sand.u32 %s156, 1
        %s585 = smul.addr %s584, 16
        %s586 = scalar_lea.vmem [#allocation10], %s585
        %p587 = pneg %p169
        %p588 = pneg %p166
        %p589 = pneg %p190
        %p590 = pneg %p187
        %p591 = pneg %p211
        %p592 = pneg %p208
        %p593 = pneg %p232
        %p594 = pneg %p229
        %p595 = pneg %p253
        %p596 = pneg %p250
        %p597 = pneg %p274
        %p598 = pneg %p271
        %p599 = pneg %p295
        %p600 = pneg %p292
        %p601 = pneg %p331
        %p602 = pneg %p328
        %s603 = sand.u32 %s318, 1
        %s604 = scalar_lea.sflag [#allocation6], %s603
        %s605 = sand.u32 %s318, 1
        %s606 = smul.addr %s605, 16
        %s607 = scalar_lea.vmem [#allocation15], %s606
        %p608 = pneg %p367
        %p609 = pneg %p364
        %s610 = sand.u32 %s354, 1
        %s611 = scalar_lea.sflag [#allocation17], %s610
        %s612 = sand.u32 %s354, 1
        %s613 = smul.addr %s612, 16
        %s614 = scalar_lea.vmem [#allocation16], %s613
        %s615 = ssub.s32 0, %s45
        %s616 = ssub.s32 0, %s45
        %s617 = smul.u32 %s45, 2
        %s618 = ssub.s32 0, %s617
        %s619 = smul.u32 %s46, %s618
        %s620 = sadd.s32 %s45, %s619
        %s621 = smul.u32 %s45, 2
        %s622 = ssub.s32 0, %s621
        %s623 = smul.u32 %s46, %s622
        %s624 = sadd.s32 %s45, %s623
        %v626 = vld [vmem:[%s4] sm:$0x3]
        %v627 = vld [vmem:[%s5] sm:$0x3]
        %p628 = scmp.eq.s32.totalorder %s46, 0
        // Predicated region
        $region85: #{tpu_custom_call.1} parent=59 // pred_check
          %p629 = pneg %p628
        $region86: #{tpu_custom_call.1} parent=59 // pred_check_branch
          %631 = sbr.rel (%p629) target = $region88
        $region87: #{tpu_custom_call.1} parent=59 // pred_region
          %v632 = vld [vmem:[%s521] sm:$0xff]
          %v633 = vld [vmem:[%s521 + $0x8] sm:$0xff]
          %v634 = vld [vmem:[%s530] sm:$0xff]
          %v635 = vld [vmem:[%s530 + $0x8] sm:$0xff]
          %v636 = vadd.f32 %v632, %v634
          %v637 = vadd.f32 %v633, %v635
          %v638 = vld [vmem:[%s539] sm:$0xff]
          %v639 = vld [vmem:[%s539 + $0x8] sm:$0xff]
          %v640 = vld [vmem:[%s548] sm:$0xff]
          %v641 = vld [vmem:[%s548 + $0x8] sm:$0xff]
          %v642 = vadd.f32 %v638, %v640
          %v643 = vadd.f32 %v639, %v641
          %644 = vst [vmem:[%s614] sm:$0xff] %v636
          %vm645 = vcmask 130048
          %646 = vst.msk [vmem:[%s614 + $0x8] sm:$0xff] %vm645, %v637
          %v647 = vsel %vm645, %v637, 0.0
          %v648 = vadd.f32 %v636, %v647
          %649 = vadd.xlane.f32.xlu0 %v648
          %v650 = vpop.xlane.xlu0 %649
          %v651 = vrcp.pop 144.0
          %v652 = vmul.f32 %v650, %v651
          %v653 = vsub.f32 %v636, %v652
          %v654 = vsub.f32 %v637, %v652
          %v655 = vmul.f32 %v653, %v653
          %v656 = vmul.f32 %v654, %v654
          %v657 = vsel %vm645, %v656, 0.0
          %v658 = vadd.f32 %v655, %v657
          %659 = vadd.xlane.f32.xlu0 %v658
          %v660 = vpop.xlane.xlu0 %659
          %v661 = vmul.f32 %v660, %v651
          %v662 = vadd.f32 %v661, 1e-05
          %v663 = vrsqrt.pop %v662
          %v664 = vmul.f32 %v653, %v663
          %v665 = vmul.f32 %v654, %v663
          %v667 = vlaneseq
          %v668 = vshrl.u32 %v667, 7
          %v669 = vsub.s32 0, %v668
          %v670 = vrot.slane %v626, %v669
          %v671 = vlaneseq
          %v672 = vshrl.u32 %v671, 7
          %v673 = vsub.s32 1, %v672
          %v674 = vrot.slane %v626, %v673
          %v677 = vmul.f32 %v664, %v670
          %v678 = vmul.f32 %v665, %v674
          %v680 = vlaneseq
          %v681 = vshrl.u32 %v680, 7
          %v682 = vsub.s32 0, %v681
          %v683 = vrot.slane %v627, %v682
          %v684 = vlaneseq
          %v685 = vshrl.u32 %v684, 7
          %v686 = vsub.s32 1, %v685
          %v687 = vrot.slane %v627, %v686
          %v690 = vadd.f32 %v677, %v683
          %v691 = vadd.f32 %v678, %v687
          %v692 = vpack.c.bf16 %v690, %v690
          %v693 = vpack.c.bf16 %v691, %v691
          %v694 = vsel %vm645, %v643, 0.0
          %v695 = vadd.f32 %v642, %v694
          %696 = vadd.xlane.f32.xlu0 %v695
          %v697 = vpop.xlane.xlu0 %696
          %v698 = vmul.f32 %v697, %v651
          %v699 = vsub.f32 %v642, %v698
          %v700 = vsub.f32 %v643, %v698
          %v701 = vmul.f32 %v699, %v699
          %v702 = vmul.f32 %v700, %v700
          %v703 = vsel %vm645, %v702, 0.0
          %v704 = vadd.f32 %v701, %v703
          %705 = vadd.xlane.f32.xlu0 %v704
          %v706 = vpop.xlane.xlu0 %705
          %v707 = vmul.f32 %v706, %v651
          %v708 = vadd.f32 %v707, 1e-05
          %v709 = vrsqrt.pop %v708
          %v710 = vmul.f32 %v699, %v709
          %v711 = vmul.f32 %v700, %v709
          %v712 = vmul.f32 %v710, %v670
          %v713 = vmul.f32 %v711, %v674
          %v714 = vadd.f32 %v712, %v683
          %v715 = vadd.f32 %v713, %v687
          %v716 = vpack.c.bf16 %v714, %v714
          %v717 = vpack.c.bf16 %v715, %v715
          %v720 = vunpack.c.l.b16 %v692
          %v721 = vunpack.c.l.b16 %v693
          %v722 = vpack.c.b16 %v721, %v720
          %vm724 = vcmask 1043456
          %vm725 = vcmask 130052
          %vm726 = vmor %vm725, %vm724
          %727 = vst.msk [vmem:[#allocation2] sm:$0xff] %vm726, %v722
          %v730 = vunpack.c.l.b16 %v716
          %v731 = vunpack.c.l.b16 %v717
          %v732 = vpack.c.b16 %v731, %v730
          %734 = vst.msk [vmem:[#allocation3] sm:$0xff] %vm726, %v732
          %v735 = vld [vmem:[#allocation12] sm:$0xff]
          %v736 = vld [vmem:[#allocation12 + $0x8] sm:$0xff]
          %v737 = vld [vmem:[#allocation12 + $0x10] sm:$0xff]
          %v738 = vld [vmem:[#allocation12 + $0x18] sm:$0xff]
          %v739 = vld [vmem:[#allocation12 + $0x20] sm:$0xff]
          %v740 = vld [vmem:[#allocation12 + $0x28] sm:$0xff]
          %v741 = vld [vmem:[#allocation12 + $0x30] sm:$0xff]
          %v742 = vld [vmem:[#allocation12 + $0x38] sm:$0xff]
          %v743 = vld [vmem:[#allocation12 + $0x40] sm:$0xff]
          %v744 = vld [vmem:[#allocation12 + $0x48] sm:$0xff]
          %v745 = vld [vmem:[#allocation12 + $0x50] sm:$0xff]
          %v746 = vld [vmem:[#allocation12 + $0x58] sm:$0xff]
          %v747 = vld [vmem:[#allocation12 + $0x60] sm:$0xff]
          %v748 = vld [vmem:[#allocation12 + $0x68] sm:$0xff]
          %v749 = vld [vmem:[#allocation12 + $0x70] sm:$0xff]
          %v750 = vld [vmem:[#allocation12 + $0x78] sm:$0xff]
          %v751 = vld [vmem:[#allocation12 + $0x80] sm:$0xff]
          %v752 = vld [vmem:[#allocation12 + $0x88] sm:$0xff]
          %v753 = vld [vmem:[#allocation13] sm:$0xff]
          %v754 = vld [vmem:[#allocation13 + $0x8] sm:$0xff]
          %v755 = vld [vmem:[#allocation13 + $0x10] sm:$0xff]
          %v756 = vld [vmem:[#allocation13 + $0x18] sm:$0xff]
          %v757 = vld [vmem:[#allocation13 + $0x20] sm:$0xff]
          %v758 = vld [vmem:[#allocation13 + $0x28] sm:$0xff]
          %v759 = vld [vmem:[#allocation13 + $0x30] sm:$0xff]
          %v760 = vld [vmem:[#allocation13 + $0x38] sm:$0xff]
          %v761 = vld [vmem:[#allocation13 + $0x40] sm:$0xff]
          %v762 = vld [vmem:[#allocation13 + $0x48] sm:$0xff]
          %v763 = vld [vmem:[#allocation13 + $0x50] sm:$0xff]
          %v764 = vld [vmem:[#allocation13 + $0x58] sm:$0xff]
          %v765 = vld [vmem:[#allocation13 + $0x60] sm:$0xff]
          %v766 = vld [vmem:[#allocation13 + $0x68] sm:$0xff]
          %v767 = vld [vmem:[#allocation13 + $0x70] sm:$0xff]
          %v768 = vld [vmem:[#allocation13 + $0x78] sm:$0xff]
          %v769 = vld [vmem:[#allocation13 + $0x80] sm:$0xff]
          %v770 = vld [vmem:[#allocation13 + $0x88] sm:$0xff]
          %v771 = vld [vmem:[%s8] sm:$0x3]
          %v772 = vld [vmem:[%s9] sm:$0xf]
          %vm773 = vcmask 64512
          %v775 = vsel %vm773, %v772, 0
          %v778 = vsel %vm724, %v716, 0
          %v781 = vsel %vm724, %v717, 0
          %783 = vmatprep.subr.bf16.mxu0 0
          %784 = vmatpush1.bf16.msra.mxu0 0
          %785 = vmatprep.subr.bf16.mxu0 0
          %786 = vmatpush1.bf16.msra.mxu0 0
          %787 = vmatprep.subr.bf16.mxu0 0
          %788 = vmatpush1.bf16.msra.mxu0 0
          %789 = vmatprep.subr.bf16.mxu0 0
          %790 = vmatpush1.bf16.msra.mxu0 0
          %791 = vmatprep.subr.bf16.mxu0 0
          %792 = vmatpush1.bf16.msra.mxu0 0
          %793 = vmatprep.subr.bf16.mxu0 0
          %794 = vmatpush1.bf16.msra.mxu0 0
          %795 = vmatprep.subr.bf16.mxu0 0
          %796 = vmatpush1.bf16.msra.mxu0 0
          %797 = vmatprep.subr.bf16.mxu0 %v781
          %798 = vmatpush1.bf16.msra.mxu0 %v778
          %799 = vmatprep.subr.bf16.mxu0 0
          %800 = vmatpush2.bf16.msra.mxu0 0
          %801 = vmatprep.subr.bf16.mxu0 0
          %802 = vmatpush2.bf16.msra.mxu0 0
          %803 = vmatprep.subr.bf16.mxu0 0
          %804 = vmatpush2.bf16.msra.mxu0 0
          %805 = vmatprep.subr.bf16.mxu0 0
          %806 = vmatpush2.bf16.msra.mxu0 0
          %807 = vmatprep.subr.bf16.mxu0 0
          %808 = vmatpush2.bf16.msra.mxu0 0
          %809 = vmatprep.subr.bf16.mxu0 0
          %810 = vmatpush2.bf16.msra.mxu0 0
          %811 = vmatprep.subr.bf16.mxu0 0
          %812 = vmatpush2.bf16.msra.mxu0 0
          %813 = vmatprep.subr.bf16.mxu0 0
          %814 = vmatpush2.bf16.msra.mxu0 0
          %815 = vmatprep.mubr.bf16.mxu0 0
          %816 = vmatmul.mubr.bf16.gmra.mxu0 %v775
          %v817 = vpop.f32.mrf.mxu0
          %v818 = vadd.f32 0.0, %v817
          %v819 = vpop.f32.mrf.mxu0
          %v820 = vadd.f32 0.0, %v819
          %v821 = vpop.f32.mrf.mxu0
          %v822 = vpop.f32.mrf.mxu0
          %823 = vdwg.mxu0
          %v824 = vpack.c.bf16 %v818, %v818
          %v825 = vpack.c.bf16 %v820, %v820
          %v844 = vunpack.c.l.b16 %v753
          %v845 = vunpack.c.h.b16 %v753
          %v846 = vunpack.c.l.b16 %v754
          %v847 = vunpack.c.h.b16 %v754
          %v848 = vunpack.c.l.b16 %v755
          %v849 = vunpack.c.h.b16 %v755
          %v850 = vunpack.c.l.b16 %v756
          %v851 = vunpack.c.h.b16 %v756
          %v852 = vunpack.c.l.b16 %v757
          %v853 = vunpack.c.h.b16 %v757
          %v854 = vunpack.c.l.b16 %v758
          %v855 = vunpack.c.h.b16 %v758
          %v856 = vunpack.c.l.b16 %v759
          %v857 = vunpack.c.h.b16 %v759
          %v858 = vunpack.c.l.b16 %v760
          %v859 = vunpack.c.h.b16 %v760
          %v860 = vunpack.c.l.b16 %v761
          %v861 = vunpack.c.h.b16 %v761
          %v862 = vunpack.c.l.b16 %v762
          %v863 = vunpack.c.h.b16 %v762
          %v864 = vunpack.c.l.b16 %v763
          %v865 = vunpack.c.h.b16 %v763
          %v866 = vunpack.c.l.b16 %v764
          %v867 = vunpack.c.h.b16 %v764
          %v868 = vunpack.c.l.b16 %v765
          %v869 = vunpack.c.h.b16 %v765
          %v870 = vunpack.c.l.b16 %v766
          %v871 = vunpack.c.h.b16 %v766
          %v872 = vunpack.c.l.b16 %v767
          %v873 = vunpack.c.h.b16 %v767
          %v874 = vunpack.c.l.b16 %v768
          %v875 = vunpack.c.h.b16 %v768
          %v876 = vunpack.c.l.b16 %v769
          %v877 = vunpack.c.h.b16 %v769
          %v878 = vunpack.c.l.b16 %v770
          %v879 = vunpack.c.h.b16 %v770
          %v880 = vpack.c.b16 %v846, %v844
          %v881 = vpack.c.b16 %v847, %v845
          %v882 = vpack.c.b16 %v850, %v848
          %v883 = vpack.c.b16 %v851, %v849
          %v884 = vpack.c.b16 %v854, %v852
          %v885 = vpack.c.b16 %v855, %v853
          %v886 = vpack.c.b16 %v858, %v856
          %v887 = vpack.c.b16 %v859, %v857
          %v888 = vpack.c.b16 %v862, %v860
          %v889 = vpack.c.b16 %v863, %v861
          %v890 = vpack.c.b16 %v866, %v864
          %v891 = vpack.c.b16 %v867, %v865
          %v892 = vpack.c.b16 %v870, %v868
          %v893 = vpack.c.b16 %v871, %v869
          %v894 = vpack.c.b16 %v874, %v872
          %v895 = vpack.c.b16 %v875, %v873
          %v896 = vpack.c.b16 %v878, %v876
          %v897 = vpack.c.b16 %v879, %v877
          %v917 = vsel %vm645, %v825, 0
          %919 = vmatprep.subr.bf16.mxu0 %v895
          %920 = vmatpush1.bf16.msra.mxu0 %v894
          %921 = vmatprep.subr.bf16.mxu0 %v893
          %922 = vmatpush1.bf16.msra.mxu0 %v892
          %923 = vmatprep.subr.bf16.mxu0 %v891
          %924 = vmatpush1.bf16.msra.mxu0 %v890
          %925 = vmatprep.subr.bf16.mxu0 %v889
          %926 = vmatpush1.bf16.msra.mxu0 %v888
          %927 = vmatprep.subr.bf16.mxu0 %v887
          %928 = vmatpush1.bf16.msra.mxu0 %v886
          %929 = vmatprep.subr.bf16.mxu0 %v885
          %930 = vmatpush1.bf16.msra.mxu0 %v884
          %931 = vmatprep.subr.bf16.mxu0 %v883
          %932 = vmatpush1.bf16.msra.mxu0 %v882
          %933 = vmatprep.subr.bf16.mxu0 %v881
          %934 = vmatpush1.bf16.msra.mxu0 %v880
          %935 = vmatprep.subr.bf16.mxu0 0
          %936 = vmatpush2.bf16.msra.mxu0 0
          %937 = vmatprep.subr.bf16.mxu0 0
          %938 = vmatpush2.bf16.msra.mxu0 0
          %939 = vmatprep.subr.bf16.mxu0 0
          %940 = vmatpush2.bf16.msra.mxu0 0
          %941 = vmatprep.subr.bf16.mxu0 0
          %942 = vmatpush2.bf16.msra.mxu0 0
          %943 = vmatprep.subr.bf16.mxu0 0
          %944 = vmatpush2.bf16.msra.mxu0 0
          %945 = vmatprep.subr.bf16.mxu0 0
          %946 = vmatpush2.bf16.msra.mxu0 0
          %947 = vmatprep.subr.bf16.mxu0 0
          %948 = vmatpush2.bf16.msra.mxu0 0
          %949 = vmatprep.subr.bf16.mxu0 %v897
          %950 = vmatpush2.bf16.msra.mxu0 %v896
          %951 = vmatprep.mubr.bf16.mxu0 %v917
          %952 = vmatmul.mubr.bf16.gmra.mxu0 %v824
          %v953 = vpop.f32.mrf.mxu0
          %v954 = vadd.f32 0.0, %v953
          %v955 = vpop.f32.mrf.mxu0
          %v956 = vadd.f32 0.0, %v955
          %v957 = vpop.f32.mrf.mxu0
          %v958 = vpop.f32.mrf.mxu0
          %959 = vdwg.mxu0
          %v978 = vunpack.c.l.b16 %v735
          %v979 = vunpack.c.h.b16 %v735
          %v980 = vunpack.c.l.b16 %v736
          %v981 = vunpack.c.h.b16 %v736
          %v982 = vunpack.c.l.b16 %v737
          %v983 = vunpack.c.h.b16 %v737
          %v984 = vunpack.c.l.b16 %v738
          %v985 = vunpack.c.h.b16 %v738
          %v986 = vunpack.c.l.b16 %v739
          %v987 = vunpack.c.h.b16 %v739
          %v988 = vunpack.c.l.b16 %v740
          %v989 = vunpack.c.h.b16 %v740
          %v990 = vunpack.c.l.b16 %v741
          %v991 = vunpack.c.h.b16 %v741
          %v992 = vunpack.c.l.b16 %v742
          %v993 = vunpack.c.h.b16 %v742
          %v994 = vunpack.c.l.b16 %v743
          %v995 = vunpack.c.h.b16 %v743
          %v996 = vunpack.c.l.b16 %v744
          %v997 = vunpack.c.h.b16 %v744
          %v998 = vunpack.c.l.b16 %v745
          %v999 = vunpack.c.h.b16 %v745
          %v1000 = vunpack.c.l.b16 %v746
          %v1001 = vunpack.c.h.b16 %v746
          %v1002 = vunpack.c.l.b16 %v747
          %v1003 = vunpack.c.h.b16 %v747
          %v1004 = vunpack.c.l.b16 %v748
          %v1005 = vunpack.c.h.b16 %v748
          %v1006 = vunpack.c.l.b16 %v749
          %v1007 = vunpack.c.h.b16 %v749
          %v1008 = vunpack.c.l.b16 %v750
          %v1009 = vunpack.c.h.b16 %v750
          %v1010 = vunpack.c.l.b16 %v751
          %v1011 = vunpack.c.h.b16 %v751
          %v1012 = vunpack.c.l.b16 %v752
          %v1013 = vunpack.c.h.b16 %v752
          %v1014 = vpack.c.b16 %v980, %v978
          %v1015 = vpack.c.b16 %v981, %v979
          %v1016 = vpack.c.b16 %v984, %v982
          %v1017 = vpack.c.b16 %v985, %v983
          %v1018 = vpack.c.b16 %v988, %v986
          %v1019 = vpack.c.b16 %v989, %v987
          %v1020 = vpack.c.b16 %v992, %v990
          %v1021 = vpack.c.b16 %v993, %v991
          %v1022 = vpack.c.b16 %v996, %v994
          %v1023 = vpack.c.b16 %v997, %v995
          %v1024 = vpack.c.b16 %v1000, %v998
          %v1025 = vpack.c.b16 %v1001, %v999
          %v1026 = vpack.c.b16 %v1004, %v1002
          %v1027 = vpack.c.b16 %v1005, %v1003
          %v1028 = vpack.c.b16 %v1008, %v1006
          %v1029 = vpack.c.b16 %v1009, %v1007
          %v1030 = vpack.c.b16 %v1012, %v1010
          %v1031 = vpack.c.b16 %v1013, %v1011
          %v1051 = vsel %vm645, %v693, 0
          %1053 = vmatprep.subr.bf16.mxu0 %v1029
          %1054 = vmatpush1.bf16.msra.mxu0 %v1028
          %1055 = vmatprep.subr.bf16.mxu0 %v1027
          %1056 = vmatpush1.bf16.msra.mxu0 %v1026
          %1057 = vmatprep.subr.bf16.mxu0 %v1025
          %1058 = vmatpush1.bf16.msra.mxu0 %v1024
          %1059 = vmatprep.subr.bf16.mxu0 %v1023
          %1060 = vmatpush1.bf16.msra.mxu0 %v1022
          %1061 = vmatprep.subr.bf16.mxu0 %v1021
          %1062 = vmatpush1.bf16.msra.mxu0 %v1020
          %1063 = vmatprep.subr.bf16.mxu0 %v1019
          %1064 = vmatpush1.bf16.msra.mxu0 %v1018
          %1065 = vmatprep.subr.bf16.mxu0 %v1017
          %1066 = vmatpush1.bf16.msra.mxu0 %v1016
          %1067 = vmatprep.subr.bf16.mxu0 %v1015
          %1068 = vmatpush1.bf16.msra.mxu0 %v1014
          %1069 = vmatprep.subr.bf16.mxu0 0
          %1070 = vmatpush2.bf16.msra.mxu0 0
          %1071 = vmatprep.subr.bf16.mxu0 0
          %1072 = vmatpush2.bf16.msra.mxu0 0
          %1073 = vmatprep.subr.bf16.mxu0 0
          %1074 = vmatpush2.bf16.msra.mxu0 0
          %1075 = vmatprep.subr.bf16.mxu0 0
          %1076 = vmatpush2.bf16.msra.mxu0 0
          %1077 = vmatprep.subr.bf16.mxu0 0
          %1078 = vmatpush2.bf16.msra.mxu0 0
          %1079 = vmatprep.subr.bf16.mxu0 0
          %1080 = vmatpush2.bf16.msra.mxu0 0
          %1081 = vmatprep.subr.bf16.mxu0 0
          %1082 = vmatpush2.bf16.msra.mxu0 0
          %1083 = vmatprep.subr.bf16.mxu0 %v1031
          %1084 = vmatpush2.bf16.msra.mxu0 %v1030
          %1085 = vmatprep.mubr.bf16.mxu0 %v1051
          %1086 = vmatmul.mubr.bf16.gmra.mxu0 %v692
          %v1087 = vpop.f32.mrf.mxu0
          %v1088 = vadd.f32 %v954, %v1087
          %v1089 = vpop.f32.mrf.mxu0
          %v1090 = vadd.f32 %v956, %v1089
          %v1091 = vpop.f32.mrf.mxu0
          %v1092 = vpop.f32.mrf.mxu0
          %1093 = vdwg.mxu0
          %v1095 = vlaneseq
          %v1096 = vshrl.u32 %v1095, 7
          %v1097 = vsub.s32 0, %v1096
          %v1098 = vrot.slane %v771, %v1097
          %v1099 = vlaneseq
          %v1100 = vshrl.u32 %v1099, 7
          %v1101 = vsub.s32 1, %v1100
          %v1102 = vrot.slane %v771, %v1101
          %v1105 = vadd.f32 %v1088, %v1098
          %v1106 = vadd.f32 %v1090, %v1102
          %1107 = vst [vmem:[%s607] sm:$0xff] %v1105
          %1108 = vst.msk [vmem:[%s607 + $0x8] sm:$0xff] %vm645, %v1106
        $region88: #{tpu_custom_call.1} parent=59 // pred_fallthru
          _
        %p1109 = scmp.eq.s32.totalorder %s46, 1
        // Predicated region
        $region89: #{tpu_custom_call.1} parent=59 // pred_check
          %p1110 = pneg %p1109
        $region90: #{tpu_custom_call.1} parent=59 // pred_check_branch
          %1112 = sbr.rel (%p1110) target = $region92
        $region91: #{tpu_custom_call.1} parent=59 // pred_region
          %v1113 = vld [vmem:[%s539] sm:$0xff]
          %v1114 = vld [vmem:[%s539 + $0x8] sm:$0xff]
          %v1115 = vld [vmem:[%s548] sm:$0xff]
          %v1116 = vld [vmem:[%s548 + $0x8] sm:$0xff]
          %v1117 = vadd.f32 %v1113, %v1115
          %v1118 = vadd.f32 %v1114, %v1116
          %1119 = vst [vmem:[%s614] sm:$0xff] %v1117
          %vm1120 = vcmask 130048
          %1121 = vst.msk [vmem:[%s614 + $0x8] sm:$0xff] %vm1120, %v1118
          %v1122 = vld [vmem:[#allocation3] sm:$0xff]
          %v1123 = vld [vmem:[#allocation2] sm:$0xff]
          %v1124 = vld [vmem:[#allocation12] sm:$0xff]
          %v1125 = vld [vmem:[#allocation12 + $0x8] sm:$0xff]
          %v1126 = vld [vmem:[#allocation12 + $0x10] sm:$0xff]
          %v1127 = vld [vmem:[#allocation12 + $0x18] sm:$0xff]
          %v1128 = vld [vmem:[#allocation12 + $0x20] sm:$0xff]
          %v1129 = vld [vmem:[#allocation12 + $0x28] sm:$0xff]
          %v1130 = vld [vmem:[#allocation12 + $0x30] sm:$0xff]
          %v1131 = vld [vmem:[#allocation12 + $0x38] sm:$0xff]
          %v1132 = vld [vmem:[#allocation12 + $0x40] sm:$0xff]
          %v1133 = vld [vmem:[#allocation12 + $0x48] sm:$0xff]
          %v1134 = vld [vmem:[#allocation12 + $0x50] sm:$0xff]
          %v1135 = vld [vmem:[#allocation12 + $0x58] sm:$0xff]
          %v1136 = vld [vmem:[#allocation12 + $0x60] sm:$0xff]
          %v1137 = vld [vmem:[#allocation12 + $0x68] sm:$0xff]
          %v1138 = vld [vmem:[#allocation12 + $0x70] sm:$0xff]
          %v1139 = vld [vmem:[#allocation12 + $0x78] sm:$0xff]
          %v1140 = vld [vmem:[#allocation12 + $0x80] sm:$0xff]
          %v1141 = vld [vmem:[#allocation12 + $0x88] sm:$0xff]
          %v1142 = vld [vmem:[#allocation13] sm:$0xff]
          %v1143 = vld [vmem:[#allocation13 + $0x8] sm:$0xff]
          %v1144 = vld [vmem:[#allocation13 + $0x10] sm:$0xff]
          %v1145 = vld [vmem:[#allocation13 + $0x18] sm:$0xff]
          %v1146 = vld [vmem:[#allocation13 + $0x20] sm:$0xff]
          %v1147 = vld [vmem:[#allocation13 + $0x28] sm:$0xff]
          %v1148 = vld [vmem:[#allocation13 + $0x30] sm:$0xff]
          %v1149 = vld [vmem:[#allocation13 + $0x38] sm:$0xff]
          %v1150 = vld [vmem:[#allocation13 + $0x40] sm:$0xff]
          %v1151 = vld [vmem:[#allocation13 + $0x48] sm:$0xff]
          %v1152 = vld [vmem:[#allocation13 + $0x50] sm:$0xff]
          %v1153 = vld [vmem:[#allocation13 + $0x58] sm:$0xff]
          %v1154 = vld [vmem:[#allocation13 + $0x60] sm:$0xff]
          %v1155 = vld [vmem:[#allocation13 + $0x68] sm:$0xff]
          %v1156 = vld [vmem:[#allocation13 + $0x70] sm:$0xff]
          %v1157 = vld [vmem:[#allocation13 + $0x78] sm:$0xff]
          %v1158 = vld [vmem:[#allocation13 + $0x80] sm:$0xff]
          %v1159 = vld [vmem:[#allocation13 + $0x88] sm:$0xff]
          %v1160 = vld [vmem:[%s8] sm:$0x3]
          %v1161 = vld [vmem:[%s9] sm:$0xf]
          %v1163 = vunpack.c.l.b16 %v1123
          %v1164 = vunpack.c.h.b16 %v1123
          %v1165 = vpack.c.b16 %v1163, %v1163
          %v1166 = vpack.c.b16 %v1164, %v1164
          %vm1167 = vcmask 64512
          %v1169 = vsel %vm1167, %v1161, 0
          %vm1171 = vcmask 1043456
          %v1173 = vsel %vm1171, %v1165, 0
          %v1176 = vsel %vm1171, %v1166, 0
          %1178 = vmatprep.subr.bf16.mxu0 0
          %1179 = vmatpush1.bf16.msra.mxu0 0
          %1180 = vmatprep.subr.bf16.mxu0 0
          %1181 = vmatpush1.bf16.msra.mxu0 0
          %1182 = vmatprep.subr.bf16.mxu0 0
          %1183 = vmatpush1.bf16.msra.mxu0 0
          %1184 = vmatprep.subr.bf16.mxu0 0
          %1185 = vmatpush1.bf16.msra.mxu0 0
          %1186 = vmatprep.subr.bf16.mxu0 0
          %1187 = vmatpush1.bf16.msra.mxu0 0
          %1188 = vmatprep.subr.bf16.mxu0 0
          %1189 = vmatpush1.bf16.msra.mxu0 0
          %1190 = vmatprep.subr.bf16.mxu0 0
          %1191 = vmatpush1.bf16.msra.mxu0 0
          %1192 = vmatprep.subr.bf16.mxu0 %v1176
          %1193 = vmatpush1.bf16.msra.mxu0 %v1173
          %1194 = vmatprep.subr.bf16.mxu0 0
          %1195 = vmatpush2.bf16.msra.mxu0 0
          %1196 = vmatprep.subr.bf16.mxu0 0
          %1197 = vmatpush2.bf16.msra.mxu0 0
          %1198 = vmatprep.subr.bf16.mxu0 0
          %1199 = vmatpush2.bf16.msra.mxu0 0
          %1200 = vmatprep.subr.bf16.mxu0 0
          %1201 = vmatpush2.bf16.msra.mxu0 0
          %1202 = vmatprep.subr.bf16.mxu0 0
          %1203 = vmatpush2.bf16.msra.mxu0 0
          %1204 = vmatprep.subr.bf16.mxu0 0
          %1205 = vmatpush2.bf16.msra.mxu0 0
          %1206 = vmatprep.subr.bf16.mxu0 0
          %1207 = vmatpush2.bf16.msra.mxu0 0
          %1208 = vmatprep.subr.bf16.mxu0 0
          %1209 = vmatpush2.bf16.msra.mxu0 0
          %1210 = vmatprep.mubr.bf16.mxu0 0
          %1211 = vmatmul.mubr.bf16.gmra.mxu0 %v1169
          %v1212 = vpop.f32.mrf.mxu0
          %v1213 = vadd.f32 0.0, %v1212
          %v1214 = vpop.f32.mrf.mxu0
          %v1215 = vadd.f32 0.0, %v1214
          %v1216 = vpop.f32.mrf.mxu0
          %v1217 = vpop.f32.mrf.mxu0
          %1218 = vdwg.mxu0
          %v1219 = vpack.c.bf16 %v1213, %v1213
          %v1220 = vpack.c.bf16 %v1215, %v1215
          %v1239 = vunpack.c.l.b16 %v1142
          %v1240 = vunpack.c.h.b16 %v1142
          %v1241 = vunpack.c.l.b16 %v1143
          %v1242 = vunpack.c.h.b16 %v1143
          %v1243 = vunpack.c.l.b16 %v1144
          %v1244 = vunpack.c.h.b16 %v1144
          %v1245 = vunpack.c.l.b16 %v1145
          %v1246 = vunpack.c.h.b16 %v1145
          %v1247 = vunpack.c.l.b16 %v1146
          %v1248 = vunpack.c.h.b16 %v1146
          %v1249 = vunpack.c.l.b16 %v1147
          %v1250 = vunpack.c.h.b16 %v1147
          %v1251 = vunpack.c.l.b16 %v1148
          %v1252 = vunpack.c.h.b16 %v1148
          %v1253 = vunpack.c.l.b16 %v1149
          %v1254 = vunpack.c.h.b16 %v1149
          %v1255 = vunpack.c.l.b16 %v1150
          %v1256 = vunpack.c.h.b16 %v1150
          %v1257 = vunpack.c.l.b16 %v1151
          %v1258 = vunpack.c.h.b16 %v1151
          %v1259 = vunpack.c.l.b16 %v1152
          %v1260 = vunpack.c.h.b16 %v1152
          %v1261 = vunpack.c.l.b16 %v1153
          %v1262 = vunpack.c.h.b16 %v1153
          %v1263 = vunpack.c.l.b16 %v1154
          %v1264 = vunpack.c.h.b16 %v1154
          %v1265 = vunpack.c.l.b16 %v1155
          %v1266 = vunpack.c.h.b16 %v1155
          %v1267 = vunpack.c.l.b16 %v1156
          %v1268 = vunpack.c.h.b16 %v1156
          %v1269 = vunpack.c.l.b16 %v1157
          %v1270 = vunpack.c.h.b16 %v1157
          %v1271 = vunpack.c.l.b16 %v1158
          %v1272 = vunpack.c.h.b16 %v1158
          %v1273 = vunpack.c.l.b16 %v1159
          %v1274 = vunpack.c.h.b16 %v1159
          %v1275 = vpack.c.b16 %v1241, %v1239
          %v1276 = vpack.c.b16 %v1242, %v1240
          %v1277 = vpack.c.b16 %v1245, %v1243
          %v1278 = vpack.c.b16 %v1246, %v1244
          %v1279 = vpack.c.b16 %v1249, %v1247
          %v1280 = vpack.c.b16 %v1250, %v1248
          %v1281 = vpack.c.b16 %v1253, %v1251
          %v1282 = vpack.c.b16 %v1254, %v1252
          %v1283 = vpack.c.b16 %v1257, %v1255
          %v1284 = vpack.c.b16 %v1258, %v1256
          %v1285 = vpack.c.b16 %v1261, %v1259
          %v1286 = vpack.c.b16 %v1262, %v1260
          %v1287 = vpack.c.b16 %v1265, %v1263
          %v1288 = vpack.c.b16 %v1266, %v1264
          %v1289 = vpack.c.b16 %v1269, %v1267
          %v1290 = vpack.c.b16 %v1270, %v1268
          %v1291 = vpack.c.b16 %v1273, %v1271
          %v1292 = vpack.c.b16 %v1274, %v1272
          %v1312 = vsel %vm1120, %v1220, 0
          %1314 = vmatprep.subr.bf16.mxu0 %v1290
          %1315 = vmatpush1.bf16.msra.mxu0 %v1289
          %1316 = vmatprep.subr.bf16.mxu0 %v1288
          %1317 = vmatpush1.bf16.msra.mxu0 %v1287
          %1318 = vmatprep.subr.bf16.mxu0 %v1286
          %1319 = vmatpush1.bf16.msra.mxu0 %v1285
          %1320 = vmatprep.subr.bf16.mxu0 %v1284
          %1321 = vmatpush1.bf16.msra.mxu0 %v1283
          %1322 = vmatprep.subr.bf16.mxu0 %v1282
          %1323 = vmatpush1.bf16.msra.mxu0 %v1281
          %1324 = vmatprep.subr.bf16.mxu0 %v1280
          %1325 = vmatpush1.bf16.msra.mxu0 %v1279
          %1326 = vmatprep.subr.bf16.mxu0 %v1278
          %1327 = vmatpush1.bf16.msra.mxu0 %v1277
          %1328 = vmatprep.subr.bf16.mxu0 %v1276
          %1329 = vmatpush1.bf16.msra.mxu0 %v1275
          %1330 = vmatprep.subr.bf16.mxu0 0
          %1331 = vmatpush2.bf16.msra.mxu0 0
          %1332 = vmatprep.subr.bf16.mxu0 0
          %1333 = vmatpush2.bf16.msra.mxu0 0
          %1334 = vmatprep.subr.bf16.mxu0 0
          %1335 = vmatpush2.bf16.msra.mxu0 0
          %1336 = vmatprep.subr.bf16.mxu0 0
          %1337 = vmatpush2.bf16.msra.mxu0 0
          %1338 = vmatprep.subr.bf16.mxu0 0
          %1339 = vmatpush2.bf16.msra.mxu0 0
          %1340 = vmatprep.subr.bf16.mxu0 0
          %1341 = vmatpush2.bf16.msra.mxu0 0
          %1342 = vmatprep.subr.bf16.mxu0 0
          %1343 = vmatpush2.bf16.msra.mxu0 0
          %1344 = vmatprep.subr.bf16.mxu0 %v1292
          %1345 = vmatpush2.bf16.msra.mxu0 %v1291
          %1346 = vmatprep.mubr.bf16.mxu0 %v1312
          %1347 = vmatmul.mubr.bf16.gmra.mxu0 %v1219
          %v1348 = vpop.f32.mrf.mxu0
          %v1349 = vadd.f32 0.0, %v1348
          %v1350 = vpop.f32.mrf.mxu0
          %v1351 = vadd.f32 0.0, %v1350
          %v1352 = vpop.f32.mrf.mxu0
          %v1353 = vpop.f32.mrf.mxu0
          %1354 = vdwg.mxu0
          %v1356 = vunpack.c.l.b16 %v1122
          %v1357 = vunpack.c.h.b16 %v1122
          %v1358 = vpack.c.b16 %v1356, %v1356
          %v1359 = vpack.c.b16 %v1357, %v1357
          %v1379 = vunpack.c.l.b16 %v1124
          %v1380 = vunpack.c.h.b16 %v1124
          %v1381 = vunpack.c.l.b16 %v1125
          %v1382 = vunpack.c.h.b16 %v1125
          %v1383 = vunpack.c.l.b16 %v1126
          %v1384 = vunpack.c.h.b16 %v1126
          %v1385 = vunpack.c.l.b16 %v1127
          %v1386 = vunpack.c.h.b16 %v1127
          %v1387 = vunpack.c.l.b16 %v1128
          %v1388 = vunpack.c.h.b16 %v1128
          %v1389 = vunpack.c.l.b16 %v1129
          %v1390 = vunpack.c.h.b16 %v1129
          %v1391 = vunpack.c.l.b16 %v1130
          %v1392 = vunpack.c.h.b16 %v1130
          %v1393 = vunpack.c.l.b16 %v1131
          %v1394 = vunpack.c.h.b16 %v1131
          %v1395 = vunpack.c.l.b16 %v1132
          %v1396 = vunpack.c.h.b16 %v1132
          %v1397 = vunpack.c.l.b16 %v1133
          %v1398 = vunpack.c.h.b16 %v1133
          %v1399 = vunpack.c.l.b16 %v1134
          %v1400 = vunpack.c.h.b16 %v1134
          %v1401 = vunpack.c.l.b16 %v1135
          %v1402 = vunpack.c.h.b16 %v1135
          %v1403 = vunpack.c.l.b16 %v1136
          %v1404 = vunpack.c.h.b16 %v1136
          %v1405 = vunpack.c.l.b16 %v1137
          %v1406 = vunpack.c.h.b16 %v1137
          %v1407 = vunpack.c.l.b16 %v1138
          %v1408 = vunpack.c.h.b16 %v1138
          %v1409 = vunpack.c.l.b16 %v1139
          %v1410 = vunpack.c.h.b16 %v1139
          %v1411 = vunpack.c.l.b16 %v1140
          %v1412 = vunpack.c.h.b16 %v1140
          %v1413 = vunpack.c.l.b16 %v1141
          %v1414 = vunpack.c.h.b16 %v1141
          %v1415 = vpack.c.b16 %v1381, %v1379
          %v1416 = vpack.c.b16 %v1382, %v1380
          %v1417 = vpack.c.b16 %v1385, %v1383
          %v1418 = vpack.c.b16 %v1386, %v1384
          %v1419 = vpack.c.b16 %v1389, %v1387
          %v1420 = vpack.c.b16 %v1390, %v1388
          %v1421 = vpack.c.b16 %v1393, %v1391
          %v1422 = vpack.c.b16 %v1394, %v1392
          %v1423 = vpack.c.b16 %v1397, %v1395
          %v1424 = vpack.c.b16 %v1398, %v1396
          %v1425 = vpack.c.b16 %v1401, %v1399
          %v1426 = vpack.c.b16 %v1402, %v1400
          %v1427 = vpack.c.b16 %v1405, %v1403
          %v1428 = vpack.c.b16 %v1406, %v1404
          %v1429 = vpack.c.b16 %v1409, %v1407
          %v1430 = vpack.c.b16 %v1410, %v1408
          %v1431 = vpack.c.b16 %v1413, %v1411
          %v1432 = vpack.c.b16 %v1414, %v1412
          %v1452 = vsel %vm1120, %v1359, 0
          %1454 = vmatprep.subr.bf16.mxu0 %v1430
          %1455 = vmatpush1.bf16.msra.mxu0 %v1429
          %1456 = vmatprep.subr.bf16.mxu0 %v1428
          %1457 = vmatpush1.bf16.msra.mxu0 %v1427
          %1458 = vmatprep.subr.bf16.mxu0 %v1426
          %1459 = vmatpush1.bf16.msra.mxu0 %v1425
          %1460 = vmatprep.subr.bf16.mxu0 %v1424
          %1461 = vmatpush1.bf16.msra.mxu0 %v1423
          %1462 = vmatprep.subr.bf16.mxu0 %v1422
          %1463 = vmatpush1.bf16.msra.mxu0 %v1421
          %1464 = vmatprep.subr.bf16.mxu0 %v1420
          %1465 = vmatpush1.bf16.msra.mxu0 %v1419
          %1466 = vmatprep.subr.bf16.mxu0 %v1418
          %1467 = vmatpush1.bf16.msra.mxu0 %v1417
          %1468 = vmatprep.subr.bf16.mxu0 %v1416
          %1469 = vmatpush1.bf16.msra.mxu0 %v1415
          %1470 = vmatprep.subr.bf16.mxu0 0
          %1471 = vmatpush2.bf16.msra.mxu0 0
          %1472 = vmatprep.subr.bf16.mxu0 0
          %1473 = vmatpush2.bf16.msra.mxu0 0
          %1474 = vmatprep.subr.bf16.mxu0 0
          %1475 = vmatpush2.bf16.msra.mxu0 0
          %1476 = vmatprep.subr.bf16.mxu0 0
          %1477 = vmatpush2.bf16.msra.mxu0 0
          %1478 = vmatprep.subr.bf16.mxu0 0
          %1479 = vmatpush2.bf16.msra.mxu0 0
          %1480 = vmatprep.subr.bf16.mxu0 0
          %1481 = vmatpush2.bf16.msra.mxu0 0
          %1482 = vmatprep.subr.bf16.mxu0 0
          %1483 = vmatpush2.bf16.msra.mxu0 0
          %1484 = vmatprep.subr.bf16.mxu0 %v1432
          %1485 = vmatpush2.bf16.msra.mxu0 %v1431
          %1486 = vmatprep.mubr.bf16.mxu0 %v1452
          %1487 = vmatmul.mubr.bf16.gmra.mxu0 %v1358
          %v1488 = vpop.f32.mrf.mxu0
          %v1489 = vadd.f32 %v1349, %v1488
          %v1490 = vpop.f32.mrf.mxu0
          %v1491 = vadd.f32 %v1351, %v1490
          %v1492 = vpop.f32.mrf.mxu0
          %v1493 = vpop.f32.mrf.mxu0
          %1494 = vdwg.mxu0
          %v1496 = vlaneseq
          %v1497 = vshrl.u32 %v1496, 7
          %v1498 = vsub.s32 0, %v1497
          %v1499 = vrot.slane %v1160, %v1498
          %v1500 = vlaneseq
          %v1501 = vshrl.u32 %v1500, 7
          %v1502 = vsub.s32 1, %v1501
          %v1503 = vrot.slane %v1160, %v1502
          %v1506 = vadd.f32 %v1489, %v1499
          %v1507 = vadd.f32 %v1491, %v1503
          %1508 = vst [vmem:[%s607] sm:$0xff] %v1506
          %1509 = vst.msk [vmem:[%s607 + $0x8] sm:$0xff] %vm1120, %v1507
        $region92: #{tpu_custom_call.1} parent=59 // pred_fallthru
          _
        %s1510 = sand.u32 %s318, 1
        %s1511 = scalar_lea.sflag [#allocation6], %s1510
        %s1512 = sand.u32 %s318, 1
        %s1513 = smul.addr %s1512, 16
        %s1514 = scalar_lea.vmem [#allocation15], %s1513
        %s1515 = sand.u32 %s354, 1
        %s1516 = scalar_lea.sflag [#allocation17], %s1515
        %s1517 = sand.u32 %s354, 1
        %s1518 = smul.addr %s1517, 16
        %s1519 = scalar_lea.vmem [#allocation16], %s1518
        // Predicated region
        $region93: #{tpu_custom_call.1} parent=59 // pred_check
          %p1520 = pneg %p328
        $region94: #{tpu_custom_call.1} parent=59 // pred_check_branch
          %1522 = sbr.rel (%p1520) target = $region96
        $region95: #{tpu_custom_call.1} parent=59 // pred_region
          %s1523 = smul.u32 %s45, 2
          %s1524 = ssub.s32 0, %s1523
          %s1525 = smul.u32 %s46, %s1524
          %s1526 = sadd.s32 %s45, %s1525
          %s1528 = ssub.s32 256, 256
          %1529 = vsyncadd %s1511, %s1528
          %s1530 = smul.addr %s1526, 2
          %s1531 = smul.addr %s44, 2
          %s1532 = sadd.s32 %s1530, %s1531
          %s1533 = smul.addr %s1532, 128
          %s1534 = scalar_lea.hbm %s10, %s1533
          %s1536 = sshll.u32 %s1514, 4
          %s1537 = int_to_ptr.vmem [resolvable:$true] %s1536
          %1539 = dma.vmem_to_hbm [thread:$0]  %s1537, 256, %s1534, %s1511
        $region96: #{tpu_custom_call.1} parent=59 // pred_fallthru
          _
        // Predicated region
        $region97: #{tpu_custom_call.1} parent=59 // pred_check
          %p1540 = pneg %p364
        $region98: #{tpu_custom_call.1} parent=59 // pred_check_branch
          %1542 = sbr.rel (%p1540) target = $region100
        $region99: #{tpu_custom_call.1} parent=59 // pred_region
          %s1543 = smul.u32 %s45, 2
          %s1544 = ssub.s32 0, %s1543
          %s1545 = smul.u32 %s46, %s1544
          %s1546 = sadd.s32 %s45, %s1545
          %s1548 = ssub.s32 256, 256
          %1549 = vsyncadd %s1516, %s1548
          %s1550 = smul.addr %s1546, 2
          %s1551 = smul.addr %s44, 2
          %s1552 = sadd.s32 %s1550, %s1551
          %s1553 = smul.addr %s1552, 128
          %s1554 = scalar_lea.hbm %s11, %s1553
          %s1556 = sshll.u32 %s1519, 4
          %s1557 = int_to_ptr.vmem [resolvable:$true] %s1556
          %1559 = dma.vmem_to_hbm [thread:$0]  %s1557, 256, %s1554, %s1516
        $region100: #{tpu_custom_call.1} parent=59 // pred_fallthru
          _
      $region60: #{tpu_custom_call.1} parent=5 // pred_fallthru
        _
      %p1560 = scmp.le.s32.totalorder 2, %s34
      // Predicated region
      $region101: #{tpu_custom_call.1} parent=5 // pred_check
        %p1561 = pneg %p1560
      $region102: #{tpu_custom_call.1} parent=5 // pred_check_branch
        %1563 = sbr.rel (%p1561) target = $region104
      $region103: #{tpu_custom_call.1} parent=5 // pred_region
        %s1564 = ssub.s32 %s34, 2
        // Predicated region
        $region105: #{tpu_custom_call.1} parent=103 // pred_check
          %p1565 = pneg %p334
        $region106: #{tpu_custom_call.1} parent=103 // pred_check_branch
          %1567 = sbr.rel (%p1565) target = $region108
        $region107: #{tpu_custom_call.1} parent=103 // pred_region
          %s1568 = sand.u32 %s319, 1
          %s1569 = scalar_lea.sflag [#allocation6], %s1568
          %s1570 = sand.u32 %s319, 1
          %s1571 = smul.addr %s1570, 16
          %s1572 = scalar_lea.vmem [#allocation15], %s1571
          %1573 = dma.done %s1569, 256
        $region108: #{tpu_custom_call.1} parent=103 // pred_fallthru
          _
        // Predicated region
        $region109: #{tpu_custom_call.1} parent=103 // pred_check
          %p1574 = pneg %p370
        $region110: #{tpu_custom_call.1} parent=103 // pred_check_branch
          %1576 = sbr.rel (%p1574) target = $region112
        $region111: #{tpu_custom_call.1} parent=103 // pred_region
          %s1577 = sand.u32 %s355, 1
          %s1578 = scalar_lea.sflag [#allocation17], %s1577
          %s1579 = sand.u32 %s355, 1
          %s1580 = smul.addr %s1579, 16
          %s1581 = scalar_lea.vmem [#allocation16], %s1580
          %1582 = dma.done %s1578, 256
        $region112: #{tpu_custom_call.1} parent=103 // pred_fallthru
          _
      $region104: #{tpu_custom_call.1} parent=5 // pred_fallthru
        _
    $region6: #{tpu_custom_call.1} parent=1 // loop_footer
      %s38 = sadd.s32 1, %s34
    $region7: #{tpu_custom_call.1} parent=1 // loop_footer_branch
      %33 = sbr.rel target = $region3
    $region8: #{tpu_custom_call.1} parent=1 // loop_exit
      _
    %1583 = vsyncpa [#allocation5], 1
    %s1584 = scalar_lea.sflag [#allocation5], 1
    %1585 = vsyncpa %s1584, 1
    %1586 = vsyncpa [#allocation8], 1
    %s1587 = scalar_lea.sflag [#allocation8], 1
    %1588 = vsyncpa %s1587, 1
    %1589 = vsyncpa [#allocation11], 1
    %s1590 = scalar_lea.sflag [#allocation11], 1
    %1591 = vsyncpa %s1590, 1
    %1592 = vsyncpa [#allocation14], 1
    %1593 = vsyncpa [#allocation6], 1
    %s1594 = scalar_lea.sflag [#allocation6], 1
    %1595 = vsyncpa %s1594, 1
    %1596 = vsyncpa [#allocation17], 1
    %s1597 = scalar_lea.sflag [#allocation17], 1
    %1598 = vsyncpa %s1597, 1

</llo_original>
